<compile_context>
chip_gen: v5e
topology: v5e:2x2
jax: 0.10.0
libtpu: 0.0.40
codegen_flags: <defaults>
</compile_context>

<pallas_src>
import functools
import math

import jax
import jax.numpy as jnp
from jax.experimental import pallas as pl
from jax.experimental.pallas import tpu as pltpu


def _round_up(x, m):
    return ((x + m - 1) // m) * m


def _conv_block_kernel(x_ref, wt1_ref, b1_ref, wt2_ref, b2_ref, o_ref,
                       xw1_ref, xw2_ref, *, H, W, main_off):
    """Fused (conv3x3 reflect -> BN -> LeakyReLU) x 2 for Nb images per step.

    Layout: activations are (C, Nb*HW) with the flattened spatial axis on
    lanes (lane dense for loads/stores/DMAs and for the matmul N dimension).

    x_ref   : (Nb, Cin, H*W)          f32   input block (NCHW, spatial flattened)
    wt1_ref : (Cmid, 9*Cin)           bf16  layer-1 weights * BN scale, K=(ky,kx,cin)
    b1_ref  : (Cmid, 1)               f32   folded BN shift (conv bias included)
    wt2_ref : (Cout, 9*Cmid)          bf16
    b2_ref  : (Cout, 1)               f32
    o_ref   : (Nb, Cout, H*W)         f32
    xw1_ref : (Nb, Cin,  pad_stride)  f32   scratch: flat row-reflect-padded images
    xw2_ref : (Nb, Cmid, pad_stride)  f32
    """
    HW = H * W
    Nb = x_ref.shape[0]
    base = main_off - W  # lane offset of padded row 0 (main image at main_off)

    # Lane masks for the reflect fix-up of the kx=0 / kx=2 taps (the flat
    # window wraps across image rows at w == 0 / w == W-1).
    lane = jax.lax.broadcasted_iota(jnp.int32, (1, HW), 1)
    w_first = (lane % W) == 0
    w_last = (lane % W) == (W - 1)

    def fill_padded(xw_b, img):
        # img: (C, HW) f32.  Main image = padded rows 1..H, starting at lane
        # `main_off` (a multiple of 128 -> this bulk store is lane aligned).
        xw_b[:, pl.ds(main_off, HW)] = img
        # Reflect pad=1 on rows: padded row 0 <- row 1, padded row H+1 <- row H-2.
        xw_b[:, pl.ds(base, W)] = img[:, W:2 * W]
        xw_b[:, pl.ds(base + (H + 1) * W, W)] = img[:, (H - 2) * W:(H - 1) * W]

    def build_slab(xw):
        # im2col slab assembled as a register value (no scratch slab, no
        # sub-16-row masked stores).  Tap (ky, kx) of one image is the flat
        # window at lane offset base + ky*W + (kx-1); lanes that wrapped
        # across an image-row edge are replaced by their reflection (the same
        # window shifted +-2 lanes) under a lane mask.  The single guard lane
        # on either side of each padded image is read uninitialized here but
        # is always discarded by the jnp.where masks (never OOB: pad_stride
        # covers lanes base-1 .. base+(H+2)*W).
        taps = []
        for k in range(9):
            ky, kx = divmod(k, 3)
            off = base + ky * W + (kx - 1)
            cols = []
            for b in range(Nb):
                xw_b = xw.at[b]
                win = xw_b[:, pl.ds(off, HW)]
                if kx == 0:
                    win = jnp.where(w_first, xw_b[:, pl.ds(off + 2, HW)], win)
                elif kx == 2:
                    win = jnp.where(w_last, xw_b[:, pl.ds(off - 2, HW)], win)
                cols.append(win)
            taps.append(cols[0] if Nb == 1 else jnp.concatenate(cols, axis=-1))
        return jnp.concatenate(taps, axis=0)              # (9*C, Nb*HW) f32

    def conv_bn_lrelu(slab_f32, wt_ref, b_ref):
        # Single MXU matmul: K folded (9*C), N = Nb*HW lane dense, f32 acc.
        # The only bf16 cast happens here (fix-up selects stay f32).
        acc = jnp.dot(wt_ref[...], slab_f32.astype(wt_ref.dtype),
                      preferred_element_type=jnp.float32)
        y = acc + b_ref[...]                    # BN(eval) shift + folded conv bias
        return jnp.where(y > 0, y, 0.01 * y)    # LeakyReLU(0.01); Dropout = identity

    # ---- layer 1 ----
    for b in range(Nb):
        fill_padded(xw1_ref.at[b], x_ref[b])
    y1 = conv_bn_lrelu(build_slab(xw1_ref), wt1_ref, b1_ref)   # (Cmid, Nb*HW) f32

    # ---- layer 2 (intermediate activation never leaves VMEM) ----
    for b in range(Nb):
        fill_padded(xw2_ref.at[b], y1[:, b * HW:(b + 1) * HW])
    y2 = conv_bn_lrelu(build_slab(xw2_ref), wt2_ref, b2_ref)   # (Cout, Nb*HW) f32

    for b in range(Nb):
        o_ref[b] = y2[:, b * HW:(b + 1) * HW]                  # lane-aligned stores


def conv_block_forward(x_nchw, params, *, max_images_per_step=8,
                       vmem_budget_bytes=8 << 20):
    """ConvBlock forward. x_nchw: (N, Cin, H, W) f32 -> (N, Cout, H, W) f32."""
    N, Cin, H, W = x_nchw.shape
    w1 = params["layer1"]["w"]
    w2 = params["layer2"]["w"]
    Cmid, Cout = w1.shape[-1], w2.shape[-1]
    assert w1.shape[-2] == Cin and w2.shape[-2] == Cmid
    assert H >= 2 and W >= 3, "reflect pad=1 needs H >= 2 and W >= 3"
    HW = H * W

    # Padded-image scratch layout: main image region starts at a lane offset
    # that is a multiple of 128 so the big in-kernel stores are lane aligned.
    main_off = _round_up(W + 1, 128)
    pad_stride = _round_up(main_off + (H + 1) * W + 1, 128)

    # Fold the BN scale into the conv weights (f32 multiply, then bf16 cast);
    # only the `+ shift` remains in the kernel epilogue.
    wt1 = (w1 * params["layer1"]["scale"]).reshape(9 * Cin, Cmid).T.astype(jnp.bfloat16)
    wt2 = (w2 * params["layer2"]["scale"]).reshape(9 * Cmid, Cout).T.astype(jnp.bfloat16)
    b1 = params["layer1"]["shift"].reshape(Cmid, 1).astype(jnp.float32)
    b2 = params["layer2"]["shift"].reshape(Cout, 1).astype(jnp.float32)

    # Input stays f32 in HBM (no wrapper-side cast pass); contiguous reshape only.
    x_flat = x_nchw.reshape(N, Cin, HW)

    # Images per grid step: amortize per-step overhead / weight pushes by
    # folding Nb images into the matmul N dimension, but keep >= 2 grid steps
    # (v7x dual-TC sharding of the batch) and stay far under every chip's
    # VMEM budget (v7x 64 MiB physical / 32 MiB default scoped; v5e 16 MiB).
    per_image_bytes = 4 * (2 * Cin * HW + 2 * Cout * HW       # double-buffered I/O
                           + (Cin + Cmid) * pad_stride)       # padded scratch
    cap = max(1, min(max_images_per_step, vmem_budget_bytes // per_image_bytes))
    nb = 1
    if N > 1:
        for d in range(1, N + 1):
            if d <= cap and N % d == 0 and N // d >= 2:
                nb = d

    out_flat = pl.pallas_call(
        functools.partial(_conv_block_kernel, H=H, W=W, main_off=main_off),
        out_shape=jax.ShapeDtypeStruct((N, Cout, HW), jnp.float32),
        grid=(N // nb,),
        in_specs=[
            pl.BlockSpec((nb, Cin, HW), lambda n: (n, 0, 0)),
            pl.BlockSpec((Cmid, 9 * Cin), lambda n: (0, 0)),
            pl.BlockSpec((Cmid, 1), lambda n: (0, 0)),
            pl.BlockSpec((Cout, 9 * Cmid), lambda n: (0, 0)),
            pl.BlockSpec((Cout, 1), lambda n: (0, 0)),
        ],
        out_specs=pl.BlockSpec((nb, Cout, HW), lambda n: (n, 0, 0)),
        scratch_shapes=[
            pltpu.VMEM((nb, Cin, pad_stride), jnp.float32),
            pltpu.VMEM((nb, Cmid, pad_stride), jnp.float32),
        ],
        compiler_params=pltpu.CompilerParams(
            # Batch steps are independent; lets v7x shard the grid over both TCs.
            dimension_semantics=("parallel",)),
    )(x_flat, wt1, b1, wt2, b2)

    # NCHW comes straight out of the kernel; contiguous reshape only.
    return out_flat.reshape(N, Cout, H, W)


def conv_block_reference(x, params):
    """Pure-JAX reference matching the kernel's precision choices (bf16 folded
    weights and bf16 values entering each matmul, f32 accumulation/epilogue)."""
    def layer(h, p):
        w = (p["w"] * p["scale"]).astype(jnp.bfloat16).astype(jnp.float32)
        hb = h.astype(jnp.bfloat16).astype(jnp.float32)
        hp = jnp.pad(hb, ((0, 0), (0, 0), (1, 1), (1, 1)), mode="reflect")
        y = jax.lax.conv_general_dilated(
            hp, w, window_strides=(1, 1), padding="VALID",
            dimension_numbers=("NCHW", "HWIO", "NCHW"))
        y = y + p["shift"].reshape(1, -1, 1, 1)
        return jnp.where(y > 0, y, 0.01 * y)
    return layer(layer(x, params["layer1"]), params["layer2"])


def init_conv_bn_params(key, cin, cout, eps=1e-5):
    """Deterministic synthetic parameters for Conv2d(3x3) + BatchNorm2d (eval)."""
    k1, k2, k3, k4, k5, k6 = jax.random.split(key, 6)
    fan_in = cin * 9
    bound = 1.0 / math.sqrt(fan_in)
    w = jax.random.uniform(k1, (3, 3, cin, cout), jnp.float32, -bound, bound)
    b = jax.random.uniform(k2, (cout,), jnp.float32, -bound, bound)
    gamma = 1.0 + 0.1 * jax.random.normal(k3, (cout,), jnp.float32)
    beta = 0.1 * jax.random.normal(k4, (cout,), jnp.float32)
    running_mean = 0.1 * jax.random.normal(k5, (cout,), jnp.float32)
    running_var = 1.0 + 0.1 * jnp.abs(jax.random.normal(k6, (cout,), jnp.float32))
    inv_std = 1.0 / jnp.sqrt(running_var + eps)
    scale = gamma * inv_std
    shift = beta + scale * (b - running_mean)
    return {"w": w, "scale": scale, "shift": shift}


if __name__ == "__main__":
    key = jax.random.PRNGKey(0)
    k_x, k_x8, k_p1, k_p2 = jax.random.split(key, 4)

    N, Cin, Cout, H, W = 2, 4, 8, 16, 16
    x = jax.random.normal(k_x, (N, Cin, H, W), jnp.float32)
    params = {
        "layer1": init_conv_bn_params(k_p1, Cin, Cout),
        "layer2": init_conv_bn_params(k_p2, Cout, Cout),
    }

    out = conv_block_forward(x, params)
    jax.block_until_ready(out)
    assert out.shape == (N, Cout, H, W)
    ref = conv_block_reference(x, params)
    assert jnp.allclose(out, ref, atol=1e-2, rtol=1e-2), (
        "max abs err", float(jnp.max(jnp.abs(out - ref))))

    # Larger batch exercises the Nb>1 (multiple images per grid step) path.
    x8 = jax.random.normal(k_x8, (8, Cin, H, W), jnp.float32)
    out8 = conv_block_forward(x8, params)
    jax.block_until_ready(out8)
    assert out8.shape == (8, Cout, H, W)
    ref8 = conv_block_reference(x8, params)
    assert jnp.allclose(out8, ref8, atol=1e-2, rtol=1e-2), (
        "max abs err", float(jnp.max(jnp.abs(out8 - ref8))))

    print("KERNEL_OK")
</pallas_src>

<mosaic_0001>
module attributes {stable_mosaic.version = 11 : i64} {
  func.func @_conv_block_kernel(%arg0: i32, %arg1: memref<1x4x256xf32, #tpu.memory_space<vmem>>, %arg2: memref<8x36xbf16, #tpu.memory_space<vmem>>, %arg3: memref<8x1xf32, #tpu.memory_space<vmem>>, %arg4: memref<8x72xbf16, #tpu.memory_space<vmem>>, %arg5: memref<8x1xf32, #tpu.memory_space<vmem>>, %arg6: memref<1x8x256xf32, #tpu.memory_space<vmem>>, %arg7: memref<1x4x512xf32, #tpu.memory_space<vmem>>, %arg8: memref<1x8x512xf32, #tpu.memory_space<vmem>>) attributes {dimension_semantics = [#tpu.dimension_semantics<parallel>], iteration_bounds = array<i64: 2>, scalar_prefetch = 0 : i64, scratch_operands = 2 : i64, tpu.core_type = #tpu.core_type<tc>, window_params = [{transform_indices = @transform_0, window_bounds = array<i64: 1, 4, 256>}, {pipeline_mode = #tpu.pipeline_mode<synchronous>, transform_indices = @transform_1, window_bounds = array<i64: 8, 36>}, {pipeline_mode = #tpu.pipeline_mode<synchronous>, transform_indices = @transform_2, window_bounds = array<i64: 8, 1>}, {pipeline_mode = #tpu.pipeline_mode<synchronous>, transform_indices = @transform_3, window_bounds = array<i64: 8, 72>}, {pipeline_mode = #tpu.pipeline_mode<synchronous>, transform_indices = @transform_4, window_bounds = array<i64: 8, 1>}, {transform_indices = @transform_5, window_bounds = array<i64: 1, 8, 256>}]} {
    %0 = tpu.iota {dimensions = array<i32: 1>} : vector<1x256xi32>
    %c16_i32 = arith.constant 16 : i32
    %c0_i32 = arith.constant 0 : i32
    %1 = arith.cmpi eq, %c16_i32, %c0_i32 : i32
    %c1_i32 = arith.constant 1 : i32
    %2 = arith.select %1, %c1_i32, %c16_i32 : i32
    %3 = vector.broadcast %2 : i32 to vector<1x256xi32>
    %4 = arith.remsi %0, %3 : vector<1x256xi32>
    %c0_i32_0 = arith.constant 0 : i32
    %5 = vector.broadcast %c0_i32_0 : i32 to vector<1x256xi32>
    %6 = arith.cmpi ne, %4, %5 : vector<1x256xi32>
    %c0_i32_1 = arith.constant 0 : i32
    %7 = vector.broadcast %c0_i32_1 : i32 to vector<1x256xi32>
    %8 = arith.cmpi slt, %4, %7 : vector<1x256xi32>
    %c0_i32_2 = arith.constant 0 : i32
    %9 = arith.cmpi slt, %2, %c0_i32_2 : i32
    %10 = vector.broadcast %9 : i1 to vector<1x256xi1>
    %11 = vector.broadcast %10 : vector<1x256xi1> to vector<1x256xi1>
    %12 = arith.xori %8, %11 : vector<1x256xi1>
    %13 = arith.andi %12, %6 : vector<1x256xi1>
    %14 = vector.broadcast %2 : i32 to vector<1x256xi32>
    %15 = arith.addi %4, %14 : vector<1x256xi32>
    %16 = arith.select %13, %15, %4 : vector<1x256xi1>, vector<1x256xi32>
    %c0_i32_3 = arith.constant 0 : i32
    %17 = vector.broadcast %c0_i32_3 : i32 to vector<1x256xi32>
    %18 = arith.cmpi eq, %16, %17 : vector<1x256xi32>
    %c16_i32_4 = arith.constant 16 : i32
    %c0_i32_5 = arith.constant 0 : i32
    %19 = arith.cmpi eq, %c16_i32_4, %c0_i32_5 : i32
    %c1_i32_6 = arith.constant 1 : i32
    %20 = arith.select %19, %c1_i32_6, %c16_i32_4 : i32
    %21 = vector.broadcast %20 : i32 to vector<1x256xi32>
    %22 = arith.remsi %0, %21 : vector<1x256xi32>
    %c0_i32_7 = arith.constant 0 : i32
    %23 = vector.broadcast %c0_i32_7 : i32 to vector<1x256xi32>
    %24 = arith.cmpi ne, %22, %23 : vector<1x256xi32>
    %c0_i32_8 = arith.constant 0 : i32
    %25 = vector.broadcast %c0_i32_8 : i32 to vector<1x256xi32>
    %26 = arith.cmpi slt, %22, %25 : vector<1x256xi32>
    %c0_i32_9 = arith.constant 0 : i32
    %27 = arith.cmpi slt, %20, %c0_i32_9 : i32
    %28 = vector.broadcast %27 : i1 to vector<1x256xi1>
    %29 = vector.broadcast %28 : vector<1x256xi1> to vector<1x256xi1>
    %30 = arith.xori %26, %29 : vector<1x256xi1>
    %31 = arith.andi %30, %24 : vector<1x256xi1>
    %32 = vector.broadcast %20 : i32 to vector<1x256xi32>
    %33 = arith.addi %22, %32 : vector<1x256xi32>
    %34 = arith.select %31, %33, %22 : vector<1x256xi1>, vector<1x256xi32>
    %c15_i32 = arith.constant 15 : i32
    %35 = vector.broadcast %c15_i32 : i32 to vector<1x256xi32>
    %36 = arith.cmpi eq, %34, %35 : vector<1x256xi32>
    %c0 = arith.constant 0 : index
    %c0_10 = arith.constant 0 : index
    %c0_11 = arith.constant 0 : index
    %37 = vector.load %arg1[%c0, %c0_10, %c0_11] : memref<1x4x256xf32, #tpu.memory_space<vmem>>, vector<1x4x256xf32>
    %38 = vector.shape_cast %37 : vector<1x4x256xf32> to vector<4x256xf32>
    %c0_i32_12 = arith.constant 0 : i32
    %c0_i32_13 = arith.constant 0 : i32
    %c0_i32_14 = arith.constant 0 : i32
    %39 = tpu.memref_slice %arg7[%c0_i32_12, %c0_i32_13, %c0_i32_14] : memref<1x4x512xf32, #tpu.memory_space<vmem>> -> memref<1x4x512xf32, #tpu.memory_space<vmem>>
    %40 = tpu.memref_squeeze %39 : memref<1x4x512xf32, #tpu.memory_space<vmem>> -> memref<4x512xf32, #tpu.memory_space<vmem>>
    %c0_15 = arith.constant 0 : index
    %c128 = arith.constant 128 : index
    %41 = vector.load %40[%c0_15, %c128] : memref<4x512xf32, #tpu.memory_space<vmem>>, vector<4x256xf32>
    tpu.vector_store %40[%c0_15, %c128], %38 {strides = array<i32>} : memref<4x512xf32, #tpu.memory_space<vmem>>, vector<4x256xf32>,
    %42 = vector.extract_strided_slice %38 {offsets = [0, 16], sizes = [4, 16], strides = [1, 1]} : vector<4x256xf32> to vector<4x16xf32>
    %c0_i32_16 = arith.constant 0 : i32
    %c0_i32_17 = arith.constant 0 : i32
    %c0_i32_18 = arith.constant 0 : i32
    %43 = tpu.memref_slice %arg7[%c0_i32_16, %c0_i32_17, %c0_i32_18] : memref<1x4x512xf32, #tpu.memory_space<vmem>> -> memref<1x4x512xf32, #tpu.memory_space<vmem>>
    %44 = tpu.memref_squeeze %43 : memref<1x4x512xf32, #tpu.memory_space<vmem>> -> memref<4x512xf32, #tpu.memory_space<vmem>>
    %c0_19 = arith.constant 0 : index
    %c112 = arith.constant 112 : index
    %45 = vector.load %44[%c0_19, %c112] : memref<4x512xf32, #tpu.memory_space<vmem>>, vector<4x16xf32>
    tpu.vector_store %44[%c0_19, %c112], %42 {strides = array<i32>} : memref<4x512xf32, #tpu.memory_space<vmem>>, vector<4x16xf32>,
    %46 = vector.extract_strided_slice %38 {offsets = [0, 224], sizes = [4, 16], strides = [1, 1]} : vector<4x256xf32> to vector<4x16xf32>
    %c0_i32_20 = arith.constant 0 : i32
    %c0_i32_21 = arith.constant 0 : i32
    %c0_i32_22 = arith.constant 0 : i32
    %47 = tpu.memref_slice %arg7[%c0_i32_20, %c0_i32_21, %c0_i32_22] : memref<1x4x512xf32, #tpu.memory_space<vmem>> -> memref<1x4x512xf32, #tpu.memory_space<vmem>>
    %48 = tpu.memref_squeeze %47 : memref<1x4x512xf32, #tpu.memory_space<vmem>> -> memref<4x512xf32, #tpu.memory_space<vmem>>
    %c0_23 = arith.constant 0 : index
    %c384 = arith.constant 384 : index
    %49 = vector.load %48[%c0_23, %c384] : memref<4x512xf32, #tpu.memory_space<vmem>>, vector<4x16xf32>
    tpu.vector_store %48[%c0_23, %c384], %46 {strides = array<i32>} : memref<4x512xf32, #tpu.memory_space<vmem>>, vector<4x16xf32>,
    %c0_i32_24 = arith.constant 0 : i32
    %c0_i32_25 = arith.constant 0 : i32
    %c0_i32_26 = arith.constant 0 : i32
    %50 = tpu.memref_slice %arg7[%c0_i32_24, %c0_i32_25, %c0_i32_26] : memref<1x4x512xf32, #tpu.memory_space<vmem>> -> memref<1x4x512xf32, #tpu.memory_space<vmem>>
    %51 = tpu.memref_squeeze %50 : memref<1x4x512xf32, #tpu.memory_space<vmem>> -> memref<4x512xf32, #tpu.memory_space<vmem>>
    %c0_27 = arith.constant 0 : index
    %c111 = arith.constant 111 : index
    %52 = vector.load %51[%c0_27, %c111] : memref<4x512xf32, #tpu.memory_space<vmem>>, vector<4x256xf32>
    %c0_i32_28 = arith.constant 0 : i32
    %c0_i32_29 = arith.constant 0 : i32
    %c0_i32_30 = arith.constant 0 : i32
    %53 = tpu.memref_slice %arg7[%c0_i32_28, %c0_i32_29, %c0_i32_30] : memref<1x4x512xf32, #tpu.memory_space<vmem>> -> memref<1x4x512xf32, #tpu.memory_space<vmem>>
    %54 = tpu.memref_squeeze %53 : memref<1x4x512xf32, #tpu.memory_space<vmem>> -> memref<4x512xf32, #tpu.memory_space<vmem>>
    %c0_31 = arith.constant 0 : index
    %c113 = arith.constant 113 : index
    %55 = vector.load %54[%c0_31, %c113] : memref<4x512xf32, #tpu.memory_space<vmem>>, vector<4x256xf32>
    %56 = vector.shape_cast %18 : vector<1x256xi1> to vector<1x256xi1>
    %57 = vector.broadcast %56 : vector<1x256xi1> to vector<4x256xi1>
    %58 = arith.select %57, %55, %52 : vector<4x256xi1>, vector<4x256xf32>
    %c0_i32_32 = arith.constant 0 : i32
    %c0_i32_33 = arith.constant 0 : i32
    %c0_i32_34 = arith.constant 0 : i32
    %59 = tpu.memref_slice %arg7[%c0_i32_32, %c0_i32_33, %c0_i32_34] : memref<1x4x512xf32, #tpu.memory_space<vmem>> -> memref<1x4x512xf32, #tpu.memory_space<vmem>>
    %60 = tpu.memref_squeeze %59 : memref<1x4x512xf32, #tpu.memory_space<vmem>> -> memref<4x512xf32, #tpu.memory_space<vmem>>
    %c0_35 = arith.constant 0 : index
    %c112_36 = arith.constant 112 : index
    %61 = vector.load %60[%c0_35, %c112_36] : memref<4x512xf32, #tpu.memory_space<vmem>>, vector<4x256xf32>
    %c0_i32_37 = arith.constant 0 : i32
    %c0_i32_38 = arith.constant 0 : i32
    %c0_i32_39 = arith.constant 0 : i32
    %62 = tpu.memref_slice %arg7[%c0_i32_37, %c0_i32_38, %c0_i32_39] : memref<1x4x512xf32, #tpu.memory_space<vmem>> -> memref<1x4x512xf32, #tpu.memory_space<vmem>>
    %63 = tpu.memref_squeeze %62 : memref<1x4x512xf32, #tpu.memory_space<vmem>> -> memref<4x512xf32, #tpu.memory_space<vmem>>
    %c0_40 = arith.constant 0 : index
    %c113_41 = arith.constant 113 : index
    %64 = vector.load %63[%c0_40, %c113_41] : memref<4x512xf32, #tpu.memory_space<vmem>>, vector<4x256xf32>
    %c0_i32_42 = arith.constant 0 : i32
    %c0_i32_43 = arith.constant 0 : i32
    %c0_i32_44 = arith.constant 0 : i32
    %65 = tpu.memref_slice %arg7[%c0_i32_42, %c0_i32_43, %c0_i32_44] : memref<1x4x512xf32, #tpu.memory_space<vmem>> -> memref<1x4x512xf32, #tpu.memory_space<vmem>>
    %66 = tpu.memref_squeeze %65 : memref<1x4x512xf32, #tpu.memory_space<vmem>> -> memref<4x512xf32, #tpu.memory_space<vmem>>
    %c0_45 = arith.constant 0 : index
    %c111_46 = arith.constant 111 : index
    %67 = vector.load %66[%c0_45, %c111_46] : memref<4x512xf32, #tpu.memory_space<vmem>>, vector<4x256xf32>
    %68 = vector.shape_cast %36 : vector<1x256xi1> to vector<1x256xi1>
    %69 = vector.broadcast %68 : vector<1x256xi1> to vector<4x256xi1>
    %70 = arith.select %69, %67, %64 : vector<4x256xi1>, vector<4x256xf32>
    %c0_i32_47 = arith.constant 0 : i32
    %c0_i32_48 = arith.constant 0 : i32
    %c0_i32_49 = arith.constant 0 : i32
    %71 = tpu.memref_slice %arg7[%c0_i32_47, %c0_i32_48, %c0_i32_49] : memref<1x4x512xf32, #tpu.memory_space<vmem>> -> memref<1x4x512xf32, #tpu.memory_space<vmem>>
    %72 = tpu.memref_squeeze %71 : memref<1x4x512xf32, #tpu.memory_space<vmem>> -> memref<4x512xf32, #tpu.memory_space<vmem>>
    %c0_50 = arith.constant 0 : index
    %c127 = arith.constant 127 : index
    %73 = vector.load %72[%c0_50, %c127] : memref<4x512xf32, #tpu.memory_space<vmem>>, vector<4x256xf32>
    %c0_i32_51 = arith.constant 0 : i32
    %c0_i32_52 = arith.constant 0 : i32
    %c0_i32_53 = arith.constant 0 : i32
    %74 = tpu.memref_slice %arg7[%c0_i32_51, %c0_i32_52, %c0_i32_53] : memref<1x4x512xf32, #tpu.memory_space<vmem>> -> memref<1x4x512xf32, #tpu.memory_space<vmem>>
    %75 = tpu.memref_squeeze %74 : memref<1x4x512xf32, #tpu.memory_space<vmem>> -> memref<4x512xf32, #tpu.memory_space<vmem>>
    %c0_54 = arith.constant 0 : index
    %c129 = arith.constant 129 : index
    %76 = vector.load %75[%c0_54, %c129] : memref<4x512xf32, #tpu.memory_space<vmem>>, vector<4x256xf32>
    %77 = vector.shape_cast %18 : vector<1x256xi1> to vector<1x256xi1>
    %78 = vector.broadcast %77 : vector<1x256xi1> to vector<4x256xi1>
    %79 = arith.select %78, %76, %73 : vector<4x256xi1>, vector<4x256xf32>
    %c0_i32_55 = arith.constant 0 : i32
    %c0_i32_56 = arith.constant 0 : i32
    %c0_i32_57 = arith.constant 0 : i32
    %80 = tpu.memref_slice %arg7[%c0_i32_55, %c0_i32_56, %c0_i32_57] : memref<1x4x512xf32, #tpu.memory_space<vmem>> -> memref<1x4x512xf32, #tpu.memory_space<vmem>>
    %81 = tpu.memref_squeeze %80 : memref<1x4x512xf32, #tpu.memory_space<vmem>> -> memref<4x512xf32, #tpu.memory_space<vmem>>
    %c0_58 = arith.constant 0 : index
    %c128_59 = arith.constant 128 : index
    %82 = vector.load %81[%c0_58, %c128_59] : memref<4x512xf32, #tpu.memory_space<vmem>>, vector<4x256xf32>
    %c0_i32_60 = arith.constant 0 : i32
    %c0_i32_61 = arith.constant 0 : i32
    %c0_i32_62 = arith.constant 0 : i32
    %83 = tpu.memref_slice %arg7[%c0_i32_60, %c0_i32_61, %c0_i32_62] : memref<1x4x512xf32, #tpu.memory_space<vmem>> -> memref<1x4x512xf32, #tpu.memory_space<vmem>>
    %84 = tpu.memref_squeeze %83 : memref<1x4x512xf32, #tpu.memory_space<vmem>> -> memref<4x512xf32, #tpu.memory_space<vmem>>
    %c0_63 = arith.constant 0 : index
    %c129_64 = arith.constant 129 : index
    %85 = vector.load %84[%c0_63, %c129_64] : memref<4x512xf32, #tpu.memory_space<vmem>>, vector<4x256xf32>
    %c0_i32_65 = arith.constant 0 : i32
    %c0_i32_66 = arith.constant 0 : i32
    %c0_i32_67 = arith.constant 0 : i32
    %86 = tpu.memref_slice %arg7[%c0_i32_65, %c0_i32_66, %c0_i32_67] : memref<1x4x512xf32, #tpu.memory_space<vmem>> -> memref<1x4x512xf32, #tpu.memory_space<vmem>>
    %87 = tpu.memref_squeeze %86 : memref<1x4x512xf32, #tpu.memory_space<vmem>> -> memref<4x512xf32, #tpu.memory_space<vmem>>
    %c0_68 = arith.constant 0 : index
    %c127_69 = arith.constant 127 : index
    %88 = vector.load %87[%c0_68, %c127_69] : memref<4x512xf32, #tpu.memory_space<vmem>>, vector<4x256xf32>
    %89 = vector.shape_cast %36 : vector<1x256xi1> to vector<1x256xi1>
    %90 = vector.broadcast %89 : vector<1x256xi1> to vector<4x256xi1>
    %91 = arith.select %90, %88, %85 : vector<4x256xi1>, vector<4x256xf32>
    %c0_i32_70 = arith.constant 0 : i32
    %c0_i32_71 = arith.constant 0 : i32
    %c0_i32_72 = arith.constant 0 : i32
    %92 = tpu.memref_slice %arg7[%c0_i32_70, %c0_i32_71, %c0_i32_72] : memref<1x4x512xf32, #tpu.memory_space<vmem>> -> memref<1x4x512xf32, #tpu.memory_space<vmem>>
    %93 = tpu.memref_squeeze %92 : memref<1x4x512xf32, #tpu.memory_space<vmem>> -> memref<4x512xf32, #tpu.memory_space<vmem>>
    %c0_73 = arith.constant 0 : index
    %c143 = arith.constant 143 : index
    %94 = vector.load %93[%c0_73, %c143] : memref<4x512xf32, #tpu.memory_space<vmem>>, vector<4x256xf32>
    %c0_i32_74 = arith.constant 0 : i32
    %c0_i32_75 = arith.constant 0 : i32
    %c0_i32_76 = arith.constant 0 : i32
    %95 = tpu.memref_slice %arg7[%c0_i32_74, %c0_i32_75, %c0_i32_76] : memref<1x4x512xf32, #tpu.memory_space<vmem>> -> memref<1x4x512xf32, #tpu.memory_space<vmem>>
    %96 = tpu.memref_squeeze %95 : memref<1x4x512xf32, #tpu.memory_space<vmem>> -> memref<4x512xf32, #tpu.memory_space<vmem>>
    %c0_77 = arith.constant 0 : index
    %c145 = arith.constant 145 : index
    %97 = vector.load %96[%c0_77, %c145] : memref<4x512xf32, #tpu.memory_space<vmem>>, vector<4x256xf32>
    %98 = vector.shape_cast %18 : vector<1x256xi1> to vector<1x256xi1>
    %99 = vector.broadcast %98 : vector<1x256xi1> to vector<4x256xi1>
    %100 = arith.select %99, %97, %94 : vector<4x256xi1>, vector<4x256xf32>
    %c0_i32_78 = arith.constant 0 : i32
    %c0_i32_79 = arith.constant 0 : i32
    %c0_i32_80 = arith.constant 0 : i32
    %101 = tpu.memref_slice %arg7[%c0_i32_78, %c0_i32_79, %c0_i32_80] : memref<1x4x512xf32, #tpu.memory_space<vmem>> -> memref<1x4x512xf32, #tpu.memory_space<vmem>>
    %102 = tpu.memref_squeeze %101 : memref<1x4x512xf32, #tpu.memory_space<vmem>> -> memref<4x512xf32, #tpu.memory_space<vmem>>
    %c0_81 = arith.constant 0 : index
    %c144 = arith.constant 144 : index
    %103 = vector.load %102[%c0_81, %c144] : memref<4x512xf32, #tpu.memory_space<vmem>>, vector<4x256xf32>
    %c0_i32_82 = arith.constant 0 : i32
    %c0_i32_83 = arith.constant 0 : i32
    %c0_i32_84 = arith.constant 0 : i32
    %104 = tpu.memref_slice %arg7[%c0_i32_82, %c0_i32_83, %c0_i32_84] : memref<1x4x512xf32, #tpu.memory_space<vmem>> -> memref<1x4x512xf32, #tpu.memory_space<vmem>>
    %105 = tpu.memref_squeeze %104 : memref<1x4x512xf32, #tpu.memory_space<vmem>> -> memref<4x512xf32, #tpu.memory_space<vmem>>
    %c0_85 = arith.constant 0 : index
    %c145_86 = arith.constant 145 : index
    %106 = vector.load %105[%c0_85, %c145_86] : memref<4x512xf32, #tpu.memory_space<vmem>>, vector<4x256xf32>
    %c0_i32_87 = arith.constant 0 : i32
    %c0_i32_88 = arith.constant 0 : i32
    %c0_i32_89 = arith.constant 0 : i32
    %107 = tpu.memref_slice %arg7[%c0_i32_87, %c0_i32_88, %c0_i32_89] : memref<1x4x512xf32, #tpu.memory_space<vmem>> -> memref<1x4x512xf32, #tpu.memory_space<vmem>>
    %108 = tpu.memref_squeeze %107 : memref<1x4x512xf32, #tpu.memory_space<vmem>> -> memref<4x512xf32, #tpu.memory_space<vmem>>
    %c0_90 = arith.constant 0 : index
    %c143_91 = arith.constant 143 : index
    %109 = vector.load %108[%c0_90, %c143_91] : memref<4x512xf32, #tpu.memory_space<vmem>>, vector<4x256xf32>
    %110 = vector.shape_cast %36 : vector<1x256xi1> to vector<1x256xi1>
    %111 = vector.broadcast %110 : vector<1x256xi1> to vector<4x256xi1>
    %112 = arith.select %111, %109, %106 : vector<4x256xi1>, vector<4x256xf32>
    %113 = tpu.concatenate %58, %61, %70, %79, %82, %91, %100, %103, %112 in 0 : vector<4x256xf32>, vector<4x256xf32>, vector<4x256xf32>, vector<4x256xf32>, vector<4x256xf32>, vector<4x256xf32>, vector<4x256xf32>, vector<4x256xf32>, vector<4x256xf32> -> vector<36x256xf32>
    %c0_92 = arith.constant 0 : index
    %c0_93 = arith.constant 0 : index
    %114 = vector.load %arg2[%c0_92, %c0_93] : memref<8x36xbf16, #tpu.memory_space<vmem>>, vector<8x36xbf16>
    %115 = arith.truncf %113 : vector<36x256xf32> to vector<36x256xbf16>
    %cst = arith.constant dense<0.000000e+00> : vector<8x256xf32>
    %116 = tpu.matmul %114, %115, %cst {dimension_numbers = #tpu.dot_dimension_numbers<[1], [0], [0], [1], [0, 0, 1, 1], [], []>} : vector<8x36xbf16>, vector<36x256xbf16>, vector<8x256xf32> -> vector<8x256xf32>
    %c0_94 = arith.constant 0 : index
    %c0_95 = arith.constant 0 : index
    %117 = vector.load %arg3[%c0_94, %c0_95] : memref<8x1xf32, #tpu.memory_space<vmem>>, vector<8x1xf32>
    %118 = vector.broadcast %117 : vector<8x1xf32> to vector<8x256xf32>
    %119 = arith.addf %116, %118 : vector<8x256xf32>
    %cst_96 = arith.constant 0.000000e+00 : f32
    %120 = vector.broadcast %cst_96 : f32 to vector<8x256xf32>
    %121 = arith.cmpf ogt, %119, %120 : vector<8x256xf32>
    %cst_97 = arith.constant 0.00999999977 : f32
    %122 = vector.broadcast %cst_97 : f32 to vector<8x256xf32>
    %123 = arith.mulf %122, %119 : vector<8x256xf32>
    %124 = arith.select %121, %119, %123 : vector<8x256xi1>, vector<8x256xf32>
    %c0_i32_98 = arith.constant 0 : i32
    %c0_i32_99 = arith.constant 0 : i32
    %c0_i32_100 = arith.constant 0 : i32
    %125 = tpu.memref_slice %arg8[%c0_i32_98, %c0_i32_99, %c0_i32_100] : memref<1x8x512xf32, #tpu.memory_space<vmem>> -> memref<1x8x512xf32, #tpu.memory_space<vmem>>
    %126 = tpu.memref_squeeze %125 : memref<1x8x512xf32, #tpu.memory_space<vmem>> -> memref<8x512xf32, #tpu.memory_space<vmem>>
    %c0_101 = arith.constant 0 : index
    %c128_102 = arith.constant 128 : index
    %127 = vector.load %126[%c0_101, %c128_102] : memref<8x512xf32, #tpu.memory_space<vmem>>, vector<8x256xf32>
    tpu.vector_store %126[%c0_101, %c128_102], %124 {strides = array<i32>} : memref<8x512xf32, #tpu.memory_space<vmem>>, vector<8x256xf32>,
    %128 = vector.extract_strided_slice %124 {offsets = [0, 16], sizes = [8, 16], strides = [1, 1]} : vector<8x256xf32> to vector<8x16xf32>
    %c0_i32_103 = arith.constant 0 : i32
    %c0_i32_104 = arith.constant 0 : i32
    %c0_i32_105 = arith.constant 0 : i32
    %129 = tpu.memref_slice %arg8[%c0_i32_103, %c0_i32_104, %c0_i32_105] : memref<1x8x512xf32, #tpu.memory_space<vmem>> -> memref<1x8x512xf32, #tpu.memory_space<vmem>>
    %130 = tpu.memref_squeeze %129 : memref<1x8x512xf32, #tpu.memory_space<vmem>> -> memref<8x512xf32, #tpu.memory_space<vmem>>
    %c0_106 = arith.constant 0 : index
    %c112_107 = arith.constant 112 : index
    %131 = vector.load %130[%c0_106, %c112_107] : memref<8x512xf32, #tpu.memory_space<vmem>>, vector<8x16xf32>
    tpu.vector_store %130[%c0_106, %c112_107], %128 {strides = array<i32>} : memref<8x512xf32, #tpu.memory_space<vmem>>, vector<8x16xf32>,
    %132 = vector.extract_strided_slice %124 {offsets = [0, 224], sizes = [8, 16], strides = [1, 1]} : vector<8x256xf32> to vector<8x16xf32>
    %c0_i32_108 = arith.constant 0 : i32
    %c0_i32_109 = arith.constant 0 : i32
    %c0_i32_110 = arith.constant 0 : i32
    %133 = tpu.memref_slice %arg8[%c0_i32_108, %c0_i32_109, %c0_i32_110] : memref<1x8x512xf32, #tpu.memory_space<vmem>> -> memref<1x8x512xf32, #tpu.memory_space<vmem>>
    %134 = tpu.memref_squeeze %133 : memref<1x8x512xf32, #tpu.memory_space<vmem>> -> memref<8x512xf32, #tpu.memory_space<vmem>>
    %c0_111 = arith.constant 0 : index
    %c384_112 = arith.constant 384 : index
    %135 = vector.load %134[%c0_111, %c384_112] : memref<8x512xf32, #tpu.memory_space<vmem>>, vector<8x16xf32>
    tpu.vector_store %134[%c0_111, %c384_112], %132 {strides = array<i32>} : memref<8x512xf32, #tpu.memory_space<vmem>>, vector<8x16xf32>,
    %c0_i32_113 = arith.constant 0 : i32
    %c0_i32_114 = arith.constant 0 : i32
    %c0_i32_115 = arith.constant 0 : i32
    %136 = tpu.memref_slice %arg8[%c0_i32_113, %c0_i32_114, %c0_i32_115] : memref<1x8x512xf32, #tpu.memory_space<vmem>> -> memref<1x8x512xf32, #tpu.memory_space<vmem>>
    %137 = tpu.memref_squeeze %136 : memref<1x8x512xf32, #tpu.memory_space<vmem>> -> memref<8x512xf32, #tpu.memory_space<vmem>>
    %c0_116 = arith.constant 0 : index
    %c111_117 = arith.constant 111 : index
    %138 = vector.load %137[%c0_116, %c111_117] : memref<8x512xf32, #tpu.memory_space<vmem>>, vector<8x256xf32>
    %c0_i32_118 = arith.constant 0 : i32
    %c0_i32_119 = arith.constant 0 : i32
    %c0_i32_120 = arith.constant 0 : i32
    %139 = tpu.memref_slice %arg8[%c0_i32_118, %c0_i32_119, %c0_i32_120] : memref<1x8x512xf32, #tpu.memory_space<vmem>> -> memref<1x8x512xf32, #tpu.memory_space<vmem>>
    %140 = tpu.memref_squeeze %139 : memref<1x8x512xf32, #tpu.memory_space<vmem>> -> memref<8x512xf32, #tpu.memory_space<vmem>>
    %c0_121 = arith.constant 0 : index
    %c113_122 = arith.constant 113 : index
    %141 = vector.load %140[%c0_121, %c113_122] : memref<8x512xf32, #tpu.memory_space<vmem>>, vector<8x256xf32>
    %142 = vector.shape_cast %18 : vector<1x256xi1> to vector<1x256xi1>
    %143 = vector.broadcast %142 : vector<1x256xi1> to vector<8x256xi1>
    %144 = arith.select %143, %141, %138 : vector<8x256xi1>, vector<8x256xf32>
    %c0_i32_123 = arith.constant 0 : i32
    %c0_i32_124 = arith.constant 0 : i32
    %c0_i32_125 = arith.constant 0 : i32
    %145 = tpu.memref_slice %arg8[%c0_i32_123, %c0_i32_124, %c0_i32_125] : memref<1x8x512xf32, #tpu.memory_space<vmem>> -> memref<1x8x512xf32, #tpu.memory_space<vmem>>
    %146 = tpu.memref_squeeze %145 : memref<1x8x512xf32, #tpu.memory_space<vmem>> -> memref<8x512xf32, #tpu.memory_space<vmem>>
    %c0_126 = arith.constant 0 : index
    %c112_127 = arith.constant 112 : index
    %147 = vector.load %146[%c0_126, %c112_127] : memref<8x512xf32, #tpu.memory_space<vmem>>, vector<8x256xf32>
    %c0_i32_128 = arith.constant 0 : i32
    %c0_i32_129 = arith.constant 0 : i32
    %c0_i32_130 = arith.constant 0 : i32
    %148 = tpu.memref_slice %arg8[%c0_i32_128, %c0_i32_129, %c0_i32_130] : memref<1x8x512xf32, #tpu.memory_space<vmem>> -> memref<1x8x512xf32, #tpu.memory_space<vmem>>
    %149 = tpu.memref_squeeze %148 : memref<1x8x512xf32, #tpu.memory_space<vmem>> -> memref<8x512xf32, #tpu.memory_space<vmem>>
    %c0_131 = arith.constant 0 : index
    %c113_132 = arith.constant 113 : index
    %150 = vector.load %149[%c0_131, %c113_132] : memref<8x512xf32, #tpu.memory_space<vmem>>, vector<8x256xf32>
    %c0_i32_133 = arith.constant 0 : i32
    %c0_i32_134 = arith.constant 0 : i32
    %c0_i32_135 = arith.constant 0 : i32
    %151 = tpu.memref_slice %arg8[%c0_i32_133, %c0_i32_134, %c0_i32_135] : memref<1x8x512xf32, #tpu.memory_space<vmem>> -> memref<1x8x512xf32, #tpu.memory_space<vmem>>
    %152 = tpu.memref_squeeze %151 : memref<1x8x512xf32, #tpu.memory_space<vmem>> -> memref<8x512xf32, #tpu.memory_space<vmem>>
    %c0_136 = arith.constant 0 : index
    %c111_137 = arith.constant 111 : index
    %153 = vector.load %152[%c0_136, %c111_137] : memref<8x512xf32, #tpu.memory_space<vmem>>, vector<8x256xf32>
    %154 = vector.shape_cast %36 : vector<1x256xi1> to vector<1x256xi1>
    %155 = vector.broadcast %154 : vector<1x256xi1> to vector<8x256xi1>
    %156 = arith.select %155, %153, %150 : vector<8x256xi1>, vector<8x256xf32>
    %c0_i32_138 = arith.constant 0 : i32
    %c0_i32_139 = arith.constant 0 : i32
    %c0_i32_140 = arith.constant 0 : i32
    %157 = tpu.memref_slice %arg8[%c0_i32_138, %c0_i32_139, %c0_i32_140] : memref<1x8x512xf32, #tpu.memory_space<vmem>> -> memref<1x8x512xf32, #tpu.memory_space<vmem>>
    %158 = tpu.memref_squeeze %157 : memref<1x8x512xf32, #tpu.memory_space<vmem>> -> memref<8x512xf32, #tpu.memory_space<vmem>>
    %c0_141 = arith.constant 0 : index
    %c127_142 = arith.constant 127 : index
    %159 = vector.load %158[%c0_141, %c127_142] : memref<8x512xf32, #tpu.memory_space<vmem>>, vector<8x256xf32>
    %c0_i32_143 = arith.constant 0 : i32
    %c0_i32_144 = arith.constant 0 : i32
    %c0_i32_145 = arith.constant 0 : i32
    %160 = tpu.memref_slice %arg8[%c0_i32_143, %c0_i32_144, %c0_i32_145] : memref<1x8x512xf32, #tpu.memory_space<vmem>> -> memref<1x8x512xf32, #tpu.memory_space<vmem>>
    %161 = tpu.memref_squeeze %160 : memref<1x8x512xf32, #tpu.memory_space<vmem>> -> memref<8x512xf32, #tpu.memory_space<vmem>>
    %c0_146 = arith.constant 0 : index
    %c129_147 = arith.constant 129 : index
    %162 = vector.load %161[%c0_146, %c129_147] : memref<8x512xf32, #tpu.memory_space<vmem>>, vector<8x256xf32>
    %163 = vector.shape_cast %18 : vector<1x256xi1> to vector<1x256xi1>
    %164 = vector.broadcast %163 : vector<1x256xi1> to vector<8x256xi1>
    %165 = arith.select %164, %162, %159 : vector<8x256xi1>, vector<8x256xf32>
    %c0_i32_148 = arith.constant 0 : i32
    %c0_i32_149 = arith.constant 0 : i32
    %c0_i32_150 = arith.constant 0 : i32
    %166 = tpu.memref_slice %arg8[%c0_i32_148, %c0_i32_149, %c0_i32_150] : memref<1x8x512xf32, #tpu.memory_space<vmem>> -> memref<1x8x512xf32, #tpu.memory_space<vmem>>
    %167 = tpu.memref_squeeze %166 : memref<1x8x512xf32, #tpu.memory_space<vmem>> -> memref<8x512xf32, #tpu.memory_space<vmem>>
    %c0_151 = arith.constant 0 : index
    %c128_152 = arith.constant 128 : index
    %168 = vector.load %167[%c0_151, %c128_152] : memref<8x512xf32, #tpu.memory_space<vmem>>, vector<8x256xf32>
    %c0_i32_153 = arith.constant 0 : i32
    %c0_i32_154 = arith.constant 0 : i32
    %c0_i32_155 = arith.constant 0 : i32
    %169 = tpu.memref_slice %arg8[%c0_i32_153, %c0_i32_154, %c0_i32_155] : memref<1x8x512xf32, #tpu.memory_space<vmem>> -> memref<1x8x512xf32, #tpu.memory_space<vmem>>
    %170 = tpu.memref_squeeze %169 : memref<1x8x512xf32, #tpu.memory_space<vmem>> -> memref<8x512xf32, #tpu.memory_space<vmem>>
    %c0_156 = arith.constant 0 : index
    %c129_157 = arith.constant 129 : index
    %171 = vector.load %170[%c0_156, %c129_157] : memref<8x512xf32, #tpu.memory_space<vmem>>, vector<8x256xf32>
    %c0_i32_158 = arith.constant 0 : i32
    %c0_i32_159 = arith.constant 0 : i32
    %c0_i32_160 = arith.constant 0 : i32
    %172 = tpu.memref_slice %arg8[%c0_i32_158, %c0_i32_159, %c0_i32_160] : memref<1x8x512xf32, #tpu.memory_space<vmem>> -> memref<1x8x512xf32, #tpu.memory_space<vmem>>
    %173 = tpu.memref_squeeze %172 : memref<1x8x512xf32, #tpu.memory_space<vmem>> -> memref<8x512xf32, #tpu.memory_space<vmem>>
    %c0_161 = arith.constant 0 : index
    %c127_162 = arith.constant 127 : index
    %174 = vector.load %173[%c0_161, %c127_162] : memref<8x512xf32, #tpu.memory_space<vmem>>, vector<8x256xf32>
    %175 = vector.shape_cast %36 : vector<1x256xi1> to vector<1x256xi1>
    %176 = vector.broadcast %175 : vector<1x256xi1> to vector<8x256xi1>
    %177 = arith.select %176, %174, %171 : vector<8x256xi1>, vector<8x256xf32>
    %c0_i32_163 = arith.constant 0 : i32
    %c0_i32_164 = arith.constant 0 : i32
    %c0_i32_165 = arith.constant 0 : i32
    %178 = tpu.memref_slice %arg8[%c0_i32_163, %c0_i32_164, %c0_i32_165] : memref<1x8x512xf32, #tpu.memory_space<vmem>> -> memref<1x8x512xf32, #tpu.memory_space<vmem>>
    %179 = tpu.memref_squeeze %178 : memref<1x8x512xf32, #tpu.memory_space<vmem>> -> memref<8x512xf32, #tpu.memory_space<vmem>>
    %c0_166 = arith.constant 0 : index
    %c143_167 = arith.constant 143 : index
    %180 = vector.load %179[%c0_166, %c143_167] : memref<8x512xf32, #tpu.memory_space<vmem>>, vector<8x256xf32>
    %c0_i32_168 = arith.constant 0 : i32
    %c0_i32_169 = arith.constant 0 : i32
    %c0_i32_170 = arith.constant 0 : i32
    %181 = tpu.memref_slice %arg8[%c0_i32_168, %c0_i32_169, %c0_i32_170] : memref<1x8x512xf32, #tpu.memory_space<vmem>> -> memref<1x8x512xf32, #tpu.memory_space<vmem>>
    %182 = tpu.memref_squeeze %181 : memref<1x8x512xf32, #tpu.memory_space<vmem>> -> memref<8x512xf32, #tpu.memory_space<vmem>>
    %c0_171 = arith.constant 0 : index
    %c145_172 = arith.constant 145 : index
    %183 = vector.load %182[%c0_171, %c145_172] : memref<8x512xf32, #tpu.memory_space<vmem>>, vector<8x256xf32>
    %184 = vector.shape_cast %18 : vector<1x256xi1> to vector<1x256xi1>
    %185 = vector.broadcast %184 : vector<1x256xi1> to vector<8x256xi1>
    %186 = arith.select %185, %183, %180 : vector<8x256xi1>, vector<8x256xf32>
    %c0_i32_173 = arith.constant 0 : i32
    %c0_i32_174 = arith.constant 0 : i32
    %c0_i32_175 = arith.constant 0 : i32
    %187 = tpu.memref_slice %arg8[%c0_i32_173, %c0_i32_174, %c0_i32_175] : memref<1x8x512xf32, #tpu.memory_space<vmem>> -> memref<1x8x512xf32, #tpu.memory_space<vmem>>
    %188 = tpu.memref_squeeze %187 : memref<1x8x512xf32, #tpu.memory_space<vmem>> -> memref<8x512xf32, #tpu.memory_space<vmem>>
    %c0_176 = arith.constant 0 : index
    %c144_177 = arith.constant 144 : index
    %189 = vector.load %188[%c0_176, %c144_177] : memref<8x512xf32, #tpu.memory_space<vmem>>, vector<8x256xf32>
    %c0_i32_178 = arith.constant 0 : i32
    %c0_i32_179 = arith.constant 0 : i32
    %c0_i32_180 = arith.constant 0 : i32
    %190 = tpu.memref_slice %arg8[%c0_i32_178, %c0_i32_179, %c0_i32_180] : memref<1x8x512xf32, #tpu.memory_space<vmem>> -> memref<1x8x512xf32, #tpu.memory_space<vmem>>
    %191 = tpu.memref_squeeze %190 : memref<1x8x512xf32, #tpu.memory_space<vmem>> -> memref<8x512xf32, #tpu.memory_space<vmem>>
    %c0_181 = arith.constant 0 : index
    %c145_182 = arith.constant 145 : index
    %192 = vector.load %191[%c0_181, %c145_182] : memref<8x512xf32, #tpu.memory_space<vmem>>, vector<8x256xf32>
    %c0_i32_183 = arith.constant 0 : i32
    %c0_i32_184 = arith.constant 0 : i32
    %c0_i32_185 = arith.constant 0 : i32
    %193 = tpu.memref_slice %arg8[%c0_i32_183, %c0_i32_184, %c0_i32_185] : memref<1x8x512xf32, #tpu.memory_space<vmem>> -> memref<1x8x512xf32, #tpu.memory_space<vmem>>
    %194 = tpu.memref_squeeze %193 : memref<1x8x512xf32, #tpu.memory_space<vmem>> -> memref<8x512xf32, #tpu.memory_space<vmem>>
    %c0_186 = arith.constant 0 : index
    %c143_187 = arith.constant 143 : index
    %195 = vector.load %194[%c0_186, %c143_187] : memref<8x512xf32, #tpu.memory_space<vmem>>, vector<8x256xf32>
    %196 = vector.shape_cast %36 : vector<1x256xi1> to vector<1x256xi1>
    %197 = vector.broadcast %196 : vector<1x256xi1> to vector<8x256xi1>
    %198 = arith.select %197, %195, %192 : vector<8x256xi1>, vector<8x256xf32>
    %199 = tpu.concatenate %144, %147, %156, %165, %168, %177, %186, %189, %198 in 0 : vector<8x256xf32>, vector<8x256xf32>, vector<8x256xf32>, vector<8x256xf32>, vector<8x256xf32>, vector<8x256xf32>, vector<8x256xf32>, vector<8x256xf32>, vector<8x256xf32> -> vector<72x256xf32>
    %c0_188 = arith.constant 0 : index
    %c0_189 = arith.constant 0 : index
    %200 = vector.load %arg4[%c0_188, %c0_189] : memref<8x72xbf16, #tpu.memory_space<vmem>>, vector<8x72xbf16>
    %201 = arith.truncf %199 : vector<72x256xf32> to vector<72x256xbf16>
    %cst_190 = arith.constant dense<0.000000e+00> : vector<8x256xf32>
    %202 = tpu.matmul %200, %201, %cst_190 {dimension_numbers = #tpu.dot_dimension_numbers<[1], [0], [0], [1], [0, 0, 1, 1], [], []>} : vector<8x72xbf16>, vector<72x256xbf16>, vector<8x256xf32> -> vector<8x256xf32>
    %c0_191 = arith.constant 0 : index
    %c0_192 = arith.constant 0 : index
    %203 = vector.load %arg5[%c0_191, %c0_192] : memref<8x1xf32, #tpu.memory_space<vmem>>, vector<8x1xf32>
    %204 = vector.broadcast %203 : vector<8x1xf32> to vector<8x256xf32>
    %205 = arith.addf %202, %204 : vector<8x256xf32>
    %cst_193 = arith.constant 0.000000e+00 : f32
    %206 = vector.broadcast %cst_193 : f32 to vector<8x256xf32>
    %207 = arith.cmpf ogt, %205, %206 : vector<8x256xf32>
    %cst_194 = arith.constant 0.00999999977 : f32
    %208 = vector.broadcast %cst_194 : f32 to vector<8x256xf32>
    %209 = arith.mulf %208, %205 : vector<8x256xf32>
    %210 = arith.select %207, %205, %209 : vector<8x256xi1>, vector<8x256xf32>
    %c0_195 = arith.constant 0 : index
    %c0_196 = arith.constant 0 : index
    %c0_197 = arith.constant 0 : index
    %211 = vector.load %arg6[%c0_195, %c0_196, %c0_197] : memref<1x8x256xf32, #tpu.memory_space<vmem>>, vector<1x8x256xf32>
    %212 = vector.shape_cast %211 : vector<1x8x256xf32> to vector<8x256xf32>
    %213 = vector.shape_cast %210 : vector<8x256xf32> to vector<1x8x256xf32>
    tpu.vector_store %arg6[%c0_195, %c0_196, %c0_197], %213 {strides = array<i32>} : memref<1x8x256xf32, #tpu.memory_space<vmem>>, vector<1x8x256xf32>,
    return
  }
  func.func @transform_0(%arg0: i32) -> (i32, i32, i32) {
    %c0_i32 = arith.constant 0 : i32
    %c0_i32_0 = arith.constant 0 : i32
    %c0_i32_1 = arith.constant 0 : i32
    return %arg0, %c0_i32, %c0_i32_0 : i32, i32, i32
  }
  func.func @transform_1(%arg0: i32) -> (i32, i32) {
    %c0_i32 = arith.constant 0 : i32
    %c0_i32_0 = arith.constant 0 : i32
    %c0_i32_1 = arith.constant 0 : i32
    return %c0_i32, %c0_i32_0 : i32, i32
  }
  func.func @transform_2(%arg0: i32) -> (i32, i32) {
    %c0_i32 = arith.constant 0 : i32
    %c0_i32_0 = arith.constant 0 : i32
    %c0_i32_1 = arith.constant 0 : i32
    return %c0_i32, %c0_i32_0 : i32, i32
  }
  func.func @transform_3(%arg0: i32) -> (i32, i32) {
    %c0_i32 = arith.constant 0 : i32
    %c0_i32_0 = arith.constant 0 : i32
    %c0_i32_1 = arith.constant 0 : i32
    return %c0_i32, %c0_i32_0 : i32, i32
  }
  func.func @transform_4(%arg0: i32) -> (i32, i32) {
    %c0_i32 = arith.constant 0 : i32
    %c0_i32_0 = arith.constant 0 : i32
    %c0_i32_1 = arith.constant 0 : i32
    return %c0_i32, %c0_i32_0 : i32, i32
  }
  func.func @transform_5(%arg0: i32) -> (i32, i32, i32) {
    %c0_i32 = arith.constant 0 : i32
    %c0_i32_0 = arith.constant 0 : i32
    %c0_i32_1 = arith.constant 0 : i32
    return %arg0, %c0_i32, %c0_i32_0 : i32, i32, i32
  }
}

</mosaic_0001>

<llo_original>
// kernel: tpu_custom_call.1
$region0: #{tpu_custom_call.1}
  #allocation0 [shape = 'u32[]', space=smem, size = 0x4, offset = 0x4, fixed_abs, tag = 'smem constant byte address 0x4 - core index']
  #allocation1 [shape = 'u32[72,128]{1,0:T(1,128)}', space=vmem, size = 0x9000, scoped, tag = 'internal scratch']
  #allocation2 [shape = 'f32[1,4,512]{2,1,0:T(4,128)}', space=vmem, size = 0x2000, scoped, tag = 'scratch operand']
  #allocation3 [shape = 'f32[1,8,512]{2,1,0:T(8,128)}', space=vmem, size = 0x4000, scoped, tag = 'scratch operand']
  %s0 = inlined_call_operand.vmem [shape: f32[2,4,256], index: 0, kind: input, shape index: {}]
  %s1 = inlined_call_operand.hbm [shape: bf16[8,36], index: 1, kind: input, shape index: {}]
  %s2 = inlined_call_operand.vmem [shape: f32[8,1], index: 2, kind: input, shape index: {}]
  %s3 = inlined_call_operand.hbm [shape: bf16[8,72], index: 3, kind: input, shape index: {}]
  %s4 = inlined_call_operand.vmem [shape: f32[8,1], index: 4, kind: input, shape index: {}]
  %s5 = inlined_call_operand.hbm [shape: f32[2,8,256], index: 5, kind: output, shape index: {}]
  %s6 = sld [smem:[#allocation0]]
  $region61: #{tpu_custom_call.1} parent=0
    _
  %s8 = ssub.s32 1, %s6
  %s9 = scalar_select 0, %s8, %s6
  $region1: #{tpu_custom_call.1} parent=0
    #allocation4 [shape = 'u8[2048]{0}', space=vmem, size = 0x800, scoped, tag = 'input window, operand 1, single buffered']
    #allocation5 [shape = 's32[2]{0}', space=sflag, size = 0x8, scoped, tag = 'scoped memory for tpu_custom_call.1']
    #allocation6 [shape = 's32[2]{0}', space=sflag, size = 0x8, scoped, tag = 'scoped memory for tpu_custom_call.1']
    #allocation7 [shape = 'u8[2048]{0}', space=vmem, size = 0x800, scoped, tag = 'input window, operand 3, single buffered']
    #allocation8 [shape = 's32[1]{0}', space=sflag, size = 0x4, scoped, tag = 'scoped memory for tpu_custom_call.1']
    #allocation9 [shape = 'u8[16384]{0}', space=vmem, size = 0x4000, scoped, tag = 'output window, operand 0']
    %10 = vsyncpa [#allocation5], 0
    %11 = vsyncpa [#allocation8], 0
    %12 = vsyncpa [#allocation6], 0
    %s13 = scalar_lea.sflag [#allocation6], 1
    %14 = vsyncpa %s13, 0
    loop: start=0, step=1, limit=4
    $region2: #{tpu_custom_call.1} parent=1 // loop_pre_header
      _
    $region3: #{tpu_custom_call.1} parent=1 // loop_header
      %s16 = sphi 0, %s20
      %p17 = scmp.ge.s32.totalorder %s16, 4
      %s26 = sphi 0, %s28
      %s29 = sphi 0, %s26
      %s30 = sphi 0, %s29
      %s46 = sphi 0, %s30
      %s50 = sphi 0, %s50
      %s52 = sphi 0, %s50
      %s53 = sphi 0, %s52
      %s67 = sphi 0, %s53
      %s71 = sphi 0, %s71
      %s73 = sphi 0, %s71
      %s74 = sphi 0, %s73
      %s88 = sphi 0, %s74
      %s92 = sphi 0, %s92
      %s94 = sphi 0, %s92
      %s95 = sphi 0, %s94
      %s109 = sphi 0, %s95
      %s113 = sphi 0, %s113
      %s115 = sphi 0, %s113
      %s116 = sphi 0, %s115
      %s130 = sphi 0, %s116
      %s136 = sphi 0, %s138
      %s139 = sphi 0, %s136
      %s140 = sphi 0, %s139
      %s156 = sphi 0, %s140
    $region4: #{tpu_custom_call.1} parent=1 // loop_header_branch
      %19 = sbr.rel (%p17) target = $region8
    $region5: #{tpu_custom_call.1} parent=1 // loop_body
      %s21 = ssub.s32 %s16, 1
      %s22 = ssub.s32 %s16, 2
      %s23 = sadd.s32 %s16, 1
      %s24 = ssub.s32 %s16, %s23
      %p25 = scmp.eq.s32.totalorder %s24, 0
      %s27 = sadd.s32 %s26, 1
      %s28 = scalar_select %p25, %s26, %s27
      %p31 = pneg %p25
      %p32 = scmp.eq.s32.totalorder %s16, 1
      %p33 = por %p31, %p32
      %p34 = scmp.ne.s32.totalorder %s26, %s29
      %p35 = scmp.eq.s32.totalorder %s16, 0
      %p36 = por %p34, %p35
      %p37 = scmp.ne.s32.totalorder %s26, %s29
      %p38 = scmp.eq.s32.totalorder %s21, 1
      %p39 = por %p37, %p38
      %p40 = scmp.ne.s32.totalorder %s29, %s30
      %p41 = scmp.eq.s32.totalorder %s21, 0
      %p42 = por %p40, %p41
      %p43 = scmp.ne.s32.totalorder %s29, %s30
      %p44 = scmp.eq.s32.totalorder %s22, 1
      %p45 = por %p43, %p44
      %p47 = scmp.ne.s32.totalorder %s30, %s46
      %p48 = scmp.eq.s32.totalorder %s22, 0
      %p49 = por %p47, %p48
      %s51 = sadd.s32 %s50, 1
      %p54 = scmp.eq.s32.totalorder %s16, 1
      %p55 = scmp.ne.s32.totalorder %s50, %s52
      %p56 = scmp.eq.s32.totalorder %s16, 0
      %p57 = por %p55, %p56
      %p58 = scmp.ne.s32.totalorder %s50, %s52
      %p59 = scmp.eq.s32.totalorder %s21, 1
      %p60 = por %p58, %p59
      %p61 = scmp.ne.s32.totalorder %s52, %s53
      %p62 = scmp.eq.s32.totalorder %s21, 0
      %p63 = por %p61, %p62
      %p64 = scmp.ne.s32.totalorder %s52, %s53
      %p65 = scmp.eq.s32.totalorder %s22, 1
      %p66 = por %p64, %p65
      %p68 = scmp.ne.s32.totalorder %s53, %s67
      %p69 = scmp.eq.s32.totalorder %s22, 0
      %p70 = por %p68, %p69
      %s72 = sadd.s32 %s71, 1
      %p75 = scmp.eq.s32.totalorder %s16, 1
      %p76 = scmp.ne.s32.totalorder %s71, %s73
      %p77 = scmp.eq.s32.totalorder %s16, 0
      %p78 = por %p76, %p77
      %p79 = scmp.ne.s32.totalorder %s71, %s73
      %p80 = scmp.eq.s32.totalorder %s21, 1
      %p81 = por %p79, %p80
      %p82 = scmp.ne.s32.totalorder %s73, %s74
      %p83 = scmp.eq.s32.totalorder %s21, 0
      %p84 = por %p82, %p83
      %p85 = scmp.ne.s32.totalorder %s73, %s74
      %p86 = scmp.eq.s32.totalorder %s22, 1
      %p87 = por %p85, %p86
      %p89 = scmp.ne.s32.totalorder %s74, %s88
      %p90 = scmp.eq.s32.totalorder %s22, 0
      %p91 = por %p89, %p90
      %s93 = sadd.s32 %s92, 1
      %p96 = scmp.eq.s32.totalorder %s16, 1
      %p97 = scmp.ne.s32.totalorder %s92, %s94
      %p98 = scmp.eq.s32.totalorder %s16, 0
      %p99 = por %p97, %p98
      %p100 = scmp.ne.s32.totalorder %s92, %s94
      %p101 = scmp.eq.s32.totalorder %s21, 1
      %p102 = por %p100, %p101
      %p103 = scmp.ne.s32.totalorder %s94, %s95
      %p104 = scmp.eq.s32.totalorder %s21, 0
      %p105 = por %p103, %p104
      %p106 = scmp.ne.s32.totalorder %s94, %s95
      %p107 = scmp.eq.s32.totalorder %s22, 1
      %p108 = por %p106, %p107
      %p110 = scmp.ne.s32.totalorder %s95, %s109
      %p111 = scmp.eq.s32.totalorder %s22, 0
      %p112 = por %p110, %p111
      %s114 = sadd.s32 %s113, 1
      %p117 = scmp.eq.s32.totalorder %s16, 1
      %p118 = scmp.ne.s32.totalorder %s113, %s115
      %p119 = scmp.eq.s32.totalorder %s16, 0
      %p120 = por %p118, %p119
      %p121 = scmp.ne.s32.totalorder %s113, %s115
      %p122 = scmp.eq.s32.totalorder %s21, 1
      %p123 = por %p121, %p122
      %p124 = scmp.ne.s32.totalorder %s115, %s116
      %p125 = scmp.eq.s32.totalorder %s21, 0
      %p126 = por %p124, %p125
      %p127 = scmp.ne.s32.totalorder %s115, %s116
      %p128 = scmp.eq.s32.totalorder %s22, 1
      %p129 = por %p127, %p128
      %p131 = scmp.ne.s32.totalorder %s116, %s130
      %p132 = scmp.eq.s32.totalorder %s22, 0
      %p133 = por %p131, %p132
      %s134 = ssub.s32 %s16, %s23
      %p135 = scmp.eq.s32.totalorder %s134, 0
      %s137 = sadd.s32 %s136, 1
      %s138 = scalar_select %p135, %s136, %s137
      %p141 = pneg %p135
      %p142 = scmp.eq.s32.totalorder %s16, 1
      %p143 = por %p141, %p142
      %p144 = scmp.ne.s32.totalorder %s136, %s139
      %p145 = scmp.eq.s32.totalorder %s16, 0
      %p146 = por %p144, %p145
      %p147 = scmp.ne.s32.totalorder %s136, %s139
      %p148 = scmp.eq.s32.totalorder %s21, 1
      %p149 = por %p147, %p148
      %p150 = scmp.ne.s32.totalorder %s139, %s140
      %p151 = scmp.eq.s32.totalorder %s21, 0
      %p152 = por %p150, %p151
      %p153 = scmp.ne.s32.totalorder %s139, %s140
      %p154 = scmp.eq.s32.totalorder %s22, 1
      %p155 = por %p153, %p154
      %p157 = scmp.ne.s32.totalorder %s140, %s156
      %p158 = scmp.eq.s32.totalorder %s22, 0
      %p159 = por %p157, %p158
      %p160 = scmp.le.s32.totalorder 1, %s16
      %p161 = scmp.lt.s32.totalorder %s16, 3
      %p162 = pnand %p160, %p161
      %p163 = pneg %p162
      // Predicated region
      $region9: #{tpu_custom_call.1} parent=5 // pred_check
        _
      $region10: #{tpu_custom_call.1} parent=5 // pred_check_branch
        %165 = sbr.rel (%p162) target = $region12
      $region11: #{tpu_custom_call.1} parent=5 // pred_region
        %s166 = ssub.s32 %s16, 1
        // Predicated region
        $region13: #{tpu_custom_call.1} parent=11 // pred_check
          %p167 = pneg %p63
        $region14: #{tpu_custom_call.1} parent=11 // pred_check_branch
          %169 = sbr.rel (%p167) target = $region16
        $region15: #{tpu_custom_call.1} parent=11 // pred_region
          %171 = vsyncadd [#allocation5], 0
          %s173 = sshll.u32 %s1, 4
          %s174 = int_to_ptr.hbm [resolvable:$true] %s173
          %s175 = sshll.u32 [#allocation4], 4
          %s176 = int_to_ptr.vmem [resolvable:$true] %s175
          %178 = dma.hbm_to_vmem [thread:$0]  %s174, 64, %s176, [#allocation5]
        $region16: #{tpu_custom_call.1} parent=11 // pred_fallthru
          _
        // Predicated region
        $region17: #{tpu_custom_call.1} parent=11 // pred_check
          %p179 = pneg %p84
        $region18: #{tpu_custom_call.1} parent=11 // pred_check_branch
          %181 = sbr.rel (%p179) target = $region20
        $region19: #{tpu_custom_call.1} parent=11 // pred_region
          _
        $region20: #{tpu_custom_call.1} parent=11 // pred_fallthru
          _
        // Predicated region
        $region21: #{tpu_custom_call.1} parent=11 // pred_check
          %p182 = pneg %p105
        $region22: #{tpu_custom_call.1} parent=11 // pred_check_branch
          %184 = sbr.rel (%p182) target = $region24
        $region23: #{tpu_custom_call.1} parent=11 // pred_region
          %186 = vsyncadd [#allocation8], 0
          %s188 = sshll.u32 %s3, 4
          %s189 = int_to_ptr.hbm [resolvable:$true] %s188
          %s190 = sshll.u32 [#allocation7], 4
          %s191 = int_to_ptr.vmem [resolvable:$true] %s190
          %193 = dma.hbm_to_vmem [thread:$0]  %s189, 64, %s191, [#allocation8]
        $region24: #{tpu_custom_call.1} parent=11 // pred_fallthru
          _
        // Predicated region
        $region25: #{tpu_custom_call.1} parent=11 // pred_check
          %p194 = pneg %p126
        $region26: #{tpu_custom_call.1} parent=11 // pred_check_branch
          %196 = sbr.rel (%p194) target = $region28
        $region27: #{tpu_custom_call.1} parent=11 // pred_region
          _
        $region28: #{tpu_custom_call.1} parent=11 // pred_fallthru
          _
      $region12: #{tpu_custom_call.1} parent=5 // pred_fallthru
        _
      %p197 = scmp.lt.s32.totalorder %s16, 2
      // Predicated region
      $region29: #{tpu_custom_call.1} parent=5 // pred_check
        %p198 = pneg %p197
      $region30: #{tpu_custom_call.1} parent=5 // pred_check_branch
        %200 = sbr.rel (%p198) target = $region32
      $region31: #{tpu_custom_call.1} parent=5 // pred_region
        // Predicated region
        $region33: #{tpu_custom_call.1} parent=31 // pred_check
          %p201 = pneg %p36
        $region34: #{tpu_custom_call.1} parent=31 // pred_check_branch
          %203 = sbr.rel (%p201) target = $region36
        $region35: #{tpu_custom_call.1} parent=31 // pred_region
          %p204 = scmp.lt.s32.totalorder %s16, 1
          %s205 = scalar_select %p204, %s16, 1
          %s206 = smul.addr %s205, 2
          %s207 = smul.addr %s206, 4
          %s208 = scalar_lea.vmem %s0, %s207
        $region36: #{tpu_custom_call.1} parent=31 // pred_fallthru
          _
      $region32: #{tpu_custom_call.1} parent=5 // pred_fallthru
        _
      %p209 = scmp.le.s32.totalorder 1, %s16
      %p210 = scmp.lt.s32.totalorder %s16, 3
      %p211 = pnand %p209, %p210
      %p212 = pneg %p211
      // Predicated region
      $region37: #{tpu_custom_call.1} parent=5 // pred_check
        _
      $region38: #{tpu_custom_call.1} parent=5 // pred_check_branch
        %214 = sbr.rel (%p211) target = $region40
      $region39: #{tpu_custom_call.1} parent=5 // pred_region
        %s215 = ssub.s32 %s16, 1
        // Predicated region
        $region41: #{tpu_custom_call.1} parent=39 // pred_check
          %p216 = pneg %p63
        $region42: #{tpu_custom_call.1} parent=39 // pred_check_branch
          %218 = sbr.rel (%p216) target = $region44
        $region43: #{tpu_custom_call.1} parent=39 // pred_region
          %220 = dma.done [#allocation5], 64
        $region44: #{tpu_custom_call.1} parent=39 // pred_fallthru
          _
        // Predicated region
        $region45: #{tpu_custom_call.1} parent=39 // pred_check
          %p221 = pneg %p105
        $region46: #{tpu_custom_call.1} parent=39 // pred_check_branch
          %223 = sbr.rel (%p221) target = $region48
        $region47: #{tpu_custom_call.1} parent=39 // pred_region
          %225 = dma.done [#allocation8], 64
        $region48: #{tpu_custom_call.1} parent=39 // pred_fallthru
          _
        %p226 = scmp.lt.s32.totalorder %s21, 1
        %s227 = scalar_select %p226, %s21, 1
        %s228 = smul.addr %s227, 2
        %s229 = smul.addr %s228, 4
        %s230 = scalar_lea.vmem %s0, %s229
        %p231 = pneg %p42
        %p232 = pneg %p39
        %p233 = pneg %p63
        %p234 = pneg %p60
        %p235 = pneg %p84
        %p236 = pneg %p81
        %p237 = pneg %p105
        %p238 = pneg %p102
        %p239 = pneg %p126
        %p240 = pneg %p123
        %p241 = pneg %p152
        %p242 = pneg %p149
        %s243 = sand.u32 %s139, 1
        %s244 = scalar_lea.sflag [#allocation6], %s243
        %s245 = sand.u32 %s139, 1
        %s246 = smul.addr %s245, 16
        %s247 = scalar_lea.vmem [#allocation9], %s246
        %p248 = scmp.lt.s32.totalorder %s21, 1
        %s249 = scalar_select %p248, %s21, 1
        %s250 = smul.addr %s249, 2
        %s251 = smul.addr %s250, 4
        %s252 = scalar_lea.vmem %s0, %s251
        %v254 = vlaneseq
        %v255 = vand.u32 %v254, 127
        %v256 = vadd.s32 %v255, 128
        %vm257 = vcmp.lt.s32.totalorder %v255, 0
        %v258 = vsub.s32 0, %v255
        %v259 = vsel %vm257, %v258, %v255
        %v260 = vshrl.u32 %v259, 4
        %v261 = vand.u32 %v259, 15
        %v262 = vsub.s32 0, %v261
        %v263 = vsel %vm257, %v262, %v261
        %vm264 = vcmp.lt.s32.totalorder %v256, 0
        %v265 = vsub.s32 0, %v256
        %v266 = vsel %vm264, %v265, %v256
        %v267 = vshrl.u32 %v266, 4
        %v268 = vand.u32 %v266, 15
        %v269 = vsub.s32 0, %v268
        %v270 = vsel %vm264, %v269, %v268
        %vm271 = vcmp.ne.s32.totalorder %v263, 0
        %vm272 = vcmp.ne.s32.totalorder %v270, 0
        %vm273 = vcmp.lt.s32.totalorder %v263, 0
        %vm274 = vcmp.lt.s32.totalorder %v270, 0
        %vm275 = vmand %vm273, %vm271
        %vm276 = vmand %vm274, %vm272
        %v277 = vadd.s32 %v263, 16
        %v278 = vadd.s32 %v270, 16
        %v279 = vsel %vm275, %v277, %v263
        %v280 = vsel %vm276, %v278, %v270
        %vm281 = vcmp.eq.s32.totalorder %v279, 0
        %vm282 = vcmp.eq.s32.totalorder %v280, 0
        %vm283 = vcmp.eq.s32.totalorder %v279, 15
        %vm284 = vcmp.eq.s32.totalorder %v280, 15
        %v285 = vld [vmem:[%s252] sm:$0xff]
        %286 = vst [vmem:[#allocation2 + $0x4] sm:$0xff] %v285
        %288 = vrot.lane.b32.xlu0 %v285, 96
        %v289 = vpop.permute.xlu0 %288
        %vm291 = vcmask 1044352
        %292 = vst.msk [vmem:[#allocation2] sm:$0xf] %vm291, %v289
        %293 = vrot.lane.b32.xlu0 %v285, 32
        %v294 = vpop.permute.xlu0 %293
        %v295 = vrot.slane %v294, 4
        %vm297 = vcmask 125952
        %298 = vst.msk [vmem:[#allocation2 + $0xc] sm:$0xf] %vm297, %v295
        %v299 = vld [vmem:[#allocation2] sm:$0xff]
        %v300 = vld [vmem:[#allocation2 + $0x8] sm:$0xf]
        %v301 = vsel %vm281, 1, 0
        %v302 = vsel %vm282, 1, 0
        %vm303 = vcmp.eq.s32.totalorder %v301, 1
        %vm304 = vcmp.eq.s32.totalorder %v302, 1
        %307 = vst [vmem:[#allocation1] ss:$2 sm:$0xff] %v299
        %s308 = scalar_lea.vmem [#allocation1], 16
        %309 = vst [vmem:[%s308] ss:$2 sm:$0xff] %v300
        %v310 = vld.sshfl [vmem:[#allocation1] sm:$0xff pattern:$0x75316420]
        %v311 = vld.sshfl [vmem:[#allocation1 + $0x8] sm:$0xff pattern:$0x75316420]
        %v312 = vld.sshfl [vmem:[#allocation1 + $0x10] sm:$0xff pattern:$0x75316420]
        %313 = vrot.lane.b32.xlu0 %v310, 15
        %v314 = vpop.permute.xlu0 %313
        %315 = vrot.lane.b32.xlu0 %v311, 15
        %v316 = vpop.permute.xlu0 %315
        %317 = vrot.lane.b32.xlu0 %v312, 15
        %v318 = vpop.permute.xlu0 %317
        %vm319 = vcmask 121856
        %v320 = vsel %vm319, %v314, %v316
        %v321 = vsel %vm319, %v316, %v318
        %324 = vst [vmem:[#allocation1] ss:$2 sm:$0xff] %v299
        %s325 = scalar_lea.vmem [#allocation1], 16
        %326 = vst [vmem:[%s325] ss:$2 sm:$0xff] %v300
        %v327 = vld.sshfl [vmem:[#allocation1] sm:$0xff pattern:$0x75316420]
        %v328 = vld.sshfl [vmem:[#allocation1 + $0x8] sm:$0xff pattern:$0x75316420]
        %v329 = vld.sshfl [vmem:[#allocation1 + $0x10] sm:$0xff pattern:$0x75316420]
        %330 = vrot.lane.b32.xlu0 %v327, 17
        %v331 = vpop.permute.xlu0 %330
        %332 = vrot.lane.b32.xlu0 %v328, 17
        %v333 = vpop.permute.xlu0 %332
        %334 = vrot.lane.b32.xlu0 %v329, 17
        %v335 = vpop.permute.xlu0 %334
        %vm336 = vcmask 138240
        %v337 = vsel %vm336, %v331, %v333
        %v338 = vsel %vm336, %v333, %v335
        %v341 = vsel %vm303, %v320, %v337
        %v342 = vsel %vm304, %v321, %v338
        %v343 = vld [vmem:[#allocation2] sm:$0xff]
        %v344 = vld [vmem:[#allocation2 + $0x8] sm:$0xf]
        %v345 = vsel %vm283, 1, 0
        %v346 = vsel %vm284, 1, 0
        %vm347 = vcmp.eq.s32.totalorder %v345, 1
        %vm348 = vcmp.eq.s32.totalorder %v346, 1
        %349 = vst [vmem:[#allocation1] ss:$2 sm:$0xff] %v299
        %s350 = scalar_lea.vmem [#allocation1], 16
        %351 = vst [vmem:[%s350] ss:$2 sm:$0xff] %v300
        %v352 = vld.sshfl [vmem:[#allocation1] sm:$0xff pattern:$0x75316420]
        %v353 = vld.sshfl [vmem:[#allocation1 + $0x8] sm:$0xff pattern:$0x75316420]
        %v354 = vld.sshfl [vmem:[#allocation1 + $0x10] sm:$0xff pattern:$0x75316420]
        %355 = vrot.lane.b32.xlu0 %v352, 17
        %v356 = vpop.permute.xlu0 %355
        %357 = vrot.lane.b32.xlu0 %v353, 17
        %v358 = vpop.permute.xlu0 %357
        %359 = vrot.lane.b32.xlu0 %v354, 17
        %v360 = vpop.permute.xlu0 %359
        %v361 = vsel %vm336, %v356, %v358
        %v362 = vsel %vm336, %v358, %v360
        %365 = vst [vmem:[#allocation1] ss:$2 sm:$0xff] %v299
        %s366 = scalar_lea.vmem [#allocation1], 16
        %367 = vst [vmem:[%s366] ss:$2 sm:$0xff] %v300
        %v368 = vld.sshfl [vmem:[#allocation1] sm:$0xff pattern:$0x75316420]
        %v369 = vld.sshfl [vmem:[#allocation1 + $0x8] sm:$0xff pattern:$0x75316420]
        %v370 = vld.sshfl [vmem:[#allocation1 + $0x10] sm:$0xff pattern:$0x75316420]
        %371 = vrot.lane.b32.xlu0 %v368, 15
        %v372 = vpop.permute.xlu0 %371
        %373 = vrot.lane.b32.xlu0 %v369, 15
        %v374 = vpop.permute.xlu0 %373
        %375 = vrot.lane.b32.xlu0 %v370, 15
        %v376 = vpop.permute.xlu0 %375
        %v377 = vsel %vm319, %v372, %v374
        %v378 = vsel %vm319, %v374, %v376
        %v381 = vsel %vm347, %v361, %v377
        %v382 = vsel %vm348, %v362, %v378
        %v383 = vld [vmem:[#allocation2] sm:$0xff]
        %v384 = vld [vmem:[#allocation2 + $0x8] sm:$0xf]
        %v385 = vld [vmem:[#allocation2 + $0x4] sm:$0xff]
        %v386 = vld [vmem:[#allocation2 + $0xc] sm:$0xf]
        %389 = vst [vmem:[#allocation1] ss:$2 sm:$0xff] %v385
        %s390 = scalar_lea.vmem [#allocation1], 16
        %391 = vst [vmem:[%s390] ss:$2 sm:$0xff] %v386
        %v392 = vld.sshfl [vmem:[#allocation1] sm:$0xff pattern:$0x75316420]
        %v393 = vld.sshfl [vmem:[#allocation1 + $0x8] sm:$0xff pattern:$0x75316420]
        %v394 = vld.sshfl [vmem:[#allocation1 + $0x10] sm:$0xff pattern:$0x75316420]
        %395 = vrot.lane.b32.xlu0 %v392, 127
        %v396 = vpop.permute.xlu0 %395
        %397 = vrot.lane.b32.xlu0 %v393, 127
        %v398 = vpop.permute.xlu0 %397
        %399 = vrot.lane.b32.xlu0 %v394, 127
        %v400 = vpop.permute.xlu0 %399
        %vm401 = vcmask 1039360
        %v402 = vsel %vm401, %v396, %v398
        %v403 = vsel %vm401, %v398, %v400
        %408 = vst [vmem:[#allocation1] ss:$2 sm:$0xff] %v383
        %s409 = scalar_lea.vmem [#allocation1], 16
        %410 = vst [vmem:[%s409] ss:$2 sm:$0xff] %v384
        %v411 = vld.sshfl [vmem:[#allocation1] sm:$0xff pattern:$0x75316420]
        %v412 = vld.sshfl [vmem:[#allocation1 + $0x8] sm:$0xff pattern:$0x75316420]
        %v413 = vld.sshfl [vmem:[#allocation1 + $0x10] sm:$0xff pattern:$0x75316420]
        %414 = vrot.lane.b32.xlu0 %v411, 1
        %v415 = vpop.permute.xlu0 %414
        %416 = vrot.lane.b32.xlu0 %v412, 1
        %v417 = vpop.permute.xlu0 %416
        %418 = vrot.lane.b32.xlu0 %v413, 1
        %v419 = vpop.permute.xlu0 %418
        %vm420 = vcmask 7168
        %v421 = vsel %vm420, %v415, %v417
        %v422 = vsel %vm420, %v417, %v419
        %v425 = vsel %vm303, %v402, %v421
        %v426 = vsel %vm304, %v403, %v422
        %v427 = vld [vmem:[#allocation2 + $0x4] sm:$0xff]
        %428 = vst [vmem:[#allocation1] ss:$2 sm:$0xff] %v383
        %s429 = scalar_lea.vmem [#allocation1], 16
        %430 = vst [vmem:[%s429] ss:$2 sm:$0xff] %v384
        %v431 = vld.sshfl [vmem:[#allocation1] sm:$0xff pattern:$0x75316420]
        %v432 = vld.sshfl [vmem:[#allocation1 + $0x8] sm:$0xff pattern:$0x75316420]
        %v433 = vld.sshfl [vmem:[#allocation1 + $0x10] sm:$0xff pattern:$0x75316420]
        %434 = vrot.lane.b32.xlu0 %v431, 1
        %v435 = vpop.permute.xlu0 %434
        %436 = vrot.lane.b32.xlu0 %v432, 1
        %v437 = vpop.permute.xlu0 %436
        %438 = vrot.lane.b32.xlu0 %v433, 1
        %v439 = vpop.permute.xlu0 %438
        %v440 = vsel %vm420, %v435, %v437
        %v441 = vsel %vm420, %v437, %v439
        %444 = vst [vmem:[#allocation1] ss:$2 sm:$0xff] %v385
        %s445 = scalar_lea.vmem [#allocation1], 16
        %446 = vst [vmem:[%s445] ss:$2 sm:$0xff] %v386
        %v447 = vld.sshfl [vmem:[#allocation1] sm:$0xff pattern:$0x75316420]
        %v448 = vld.sshfl [vmem:[#allocation1 + $0x8] sm:$0xff pattern:$0x75316420]
        %v449 = vld.sshfl [vmem:[#allocation1 + $0x10] sm:$0xff pattern:$0x75316420]
        %450 = vrot.lane.b32.xlu0 %v447, 127
        %v451 = vpop.permute.xlu0 %450
        %452 = vrot.lane.b32.xlu0 %v448, 127
        %v453 = vpop.permute.xlu0 %452
        %454 = vrot.lane.b32.xlu0 %v449, 127
        %v455 = vpop.permute.xlu0 %454
        %v456 = vsel %vm401, %v451, %v453
        %v457 = vsel %vm401, %v453, %v455
        %v460 = vsel %vm347, %v440, %v456
        %v461 = vsel %vm348, %v441, %v457
        %v462 = vld [vmem:[#allocation2 + $0x4] sm:$0xff]
        %v463 = vld [vmem:[#allocation2 + $0xc] sm:$0xf]
        %466 = vst [vmem:[#allocation1] ss:$2 sm:$0xff] %v462
        %s467 = scalar_lea.vmem [#allocation1], 16
        %468 = vst [vmem:[%s467] ss:$2 sm:$0xff] %v463
        %v469 = vld.sshfl [vmem:[#allocation1] sm:$0xff pattern:$0x75316420]
        %v470 = vld.sshfl [vmem:[#allocation1 + $0x8] sm:$0xff pattern:$0x75316420]
        %v471 = vld.sshfl [vmem:[#allocation1 + $0x10] sm:$0xff pattern:$0x75316420]
        %472 = vrot.lane.b32.xlu0 %v469, 111
        %v473 = vpop.permute.xlu0 %472
        %474 = vrot.lane.b32.xlu0 %v470, 111
        %v475 = vpop.permute.xlu0 %474
        %476 = vrot.lane.b32.xlu0 %v471, 111
        %v477 = vpop.permute.xlu0 %476
        %vm478 = vcmask 908288
        %v479 = vsel %vm478, %v473, %v475
        %v480 = vsel %vm478, %v475, %v477
        %483 = vst [vmem:[#allocation1] ss:$2 sm:$0xff] %v462
        %s484 = scalar_lea.vmem [#allocation1], 16
        %485 = vst [vmem:[%s484] ss:$2 sm:$0xff] %v463
        %v486 = vld.sshfl [vmem:[#allocation1] sm:$0xff pattern:$0x75316420]
        %v487 = vld.sshfl [vmem:[#allocation1 + $0x8] sm:$0xff pattern:$0x75316420]
        %v488 = vld.sshfl [vmem:[#allocation1 + $0x10] sm:$0xff pattern:$0x75316420]
        %489 = vrot.lane.b32.xlu0 %v486, 113
        %v490 = vpop.permute.xlu0 %489
        %491 = vrot.lane.b32.xlu0 %v487, 113
        %v492 = vpop.permute.xlu0 %491
        %493 = vrot.lane.b32.xlu0 %v488, 113
        %v494 = vpop.permute.xlu0 %493
        %vm495 = vcmask 924672
        %v496 = vsel %vm495, %v490, %v492
        %v497 = vsel %vm495, %v492, %v494
        %v500 = vsel %vm303, %v479, %v496
        %v501 = vsel %vm304, %v480, %v497
        %v502 = vld [vmem:[#allocation2 + $0x4] sm:$0xff]
        %v503 = vld [vmem:[#allocation2 + $0xc] sm:$0xf]
        %504 = vst [vmem:[#allocation1] ss:$2 sm:$0xff] %v462
        %s505 = scalar_lea.vmem [#allocation1], 16
        %506 = vst [vmem:[%s505] ss:$2 sm:$0xff] %v463
        %v507 = vld.sshfl [vmem:[#allocation1] sm:$0xff pattern:$0x75316420]
        %v508 = vld.sshfl [vmem:[#allocation1 + $0x8] sm:$0xff pattern:$0x75316420]
        %v509 = vld.sshfl [vmem:[#allocation1 + $0x10] sm:$0xff pattern:$0x75316420]
        %510 = vrot.lane.b32.xlu0 %v507, 113
        %v511 = vpop.permute.xlu0 %510
        %512 = vrot.lane.b32.xlu0 %v508, 113
        %v513 = vpop.permute.xlu0 %512
        %514 = vrot.lane.b32.xlu0 %v509, 113
        %v515 = vpop.permute.xlu0 %514
        %v516 = vsel %vm495, %v511, %v513
        %v517 = vsel %vm495, %v513, %v515
        %520 = vst [vmem:[#allocation1] ss:$2 sm:$0xff] %v462
        %s521 = scalar_lea.vmem [#allocation1], 16
        %522 = vst [vmem:[%s521] ss:$2 sm:$0xff] %v463
        %v523 = vld.sshfl [vmem:[#allocation1] sm:$0xff pattern:$0x75316420]
        %v524 = vld.sshfl [vmem:[#allocation1 + $0x8] sm:$0xff pattern:$0x75316420]
        %v525 = vld.sshfl [vmem:[#allocation1 + $0x10] sm:$0xff pattern:$0x75316420]
        %526 = vrot.lane.b32.xlu0 %v523, 111
        %v527 = vpop.permute.xlu0 %526
        %528 = vrot.lane.b32.xlu0 %v524, 111
        %v529 = vpop.permute.xlu0 %528
        %530 = vrot.lane.b32.xlu0 %v525, 111
        %v531 = vpop.permute.xlu0 %530
        %v532 = vsel %vm478, %v527, %v529
        %v533 = vsel %vm478, %v529, %v531
        %v536 = vsel %vm347, %v516, %v532
        %v537 = vsel %vm348, %v517, %v533
        %s540 = scalar_lea.vmem [#allocation1], 1
        %541 = vst [vmem:[%s540] ss:$2 sm:$0xff] %v343
        %s542 = scalar_lea.vmem [#allocation1], 17
        %543 = vst [vmem:[%s542] ss:$2 sm:$0xff] %v344
        %v544 = vld.sshfl [vmem:[#allocation1] sm:$0xff pattern:$0x75316420]
        %v545 = vld.sshfl [vmem:[#allocation1 + $0x8] sm:$0xff pattern:$0x75316420]
        %v546 = vld.sshfl [vmem:[#allocation1 + $0x10] sm:$0xff pattern:$0x75316420]
        %547 = vrot.lane.b32.xlu0 %v544, 16
        %v548 = vpop.permute.xlu0 %547
        %549 = vrot.lane.b32.xlu0 %v545, 16
        %v550 = vpop.permute.xlu0 %549
        %551 = vrot.lane.b32.xlu0 %v546, 16
        %v552 = vpop.permute.xlu0 %551
        %vm553 = vcmask 130048
        %v554 = vsel %vm553, %v548, %v550
        %v555 = vsel %vm553, %v550, %v552
        %v560 = vrot.slane %v425, 4
        %v561 = vrot.slane %v426, 4
        %565 = vst [vmem:[#allocation1] ss:$2 sm:$0xff] %v427
        %v566 = vld.sshfl [vmem:[#allocation1] sm:$0xff pattern:$0x75316420]
        %v567 = vld.sshfl [vmem:[#allocation1 + $0x8] sm:$0xff pattern:$0x75316420]
        %v572 = vrot.slane %v460, 4
        %v573 = vrot.slane %v461, 4
        %s578 = scalar_lea.vmem [#allocation1], 1
        %579 = vst [vmem:[%s578] ss:$2 sm:$0xff] %v502
        %s580 = scalar_lea.vmem [#allocation1], 17
        %581 = vst [vmem:[%s580] ss:$2 sm:$0xff] %v503
        %v582 = vld.sshfl [vmem:[#allocation1] sm:$0xff pattern:$0x75316420]
        %v583 = vld.sshfl [vmem:[#allocation1 + $0x8] sm:$0xff pattern:$0x75316420]
        %v584 = vld.sshfl [vmem:[#allocation1 + $0x10] sm:$0xff pattern:$0x75316420]
        %585 = vrot.lane.b32.xlu0 %v582, 112
        %v586 = vpop.permute.xlu0 %585
        %587 = vrot.lane.b32.xlu0 %v583, 112
        %v588 = vpop.permute.xlu0 %587
        %589 = vrot.lane.b32.xlu0 %v584, 112
        %v590 = vpop.permute.xlu0 %589
        %vm591 = vcmask 916480
        %v592 = vsel %vm591, %v586, %v588
        %v593 = vsel %vm591, %v588, %v590
        %vm596 = vcmask 1043456
        %v597 = vsel %vm596, %v341, %v554
        %v598 = vsel %vm596, %v342, %v555
        %v599 = vsel %vm596, %v381, %v560
        %v600 = vsel %vm596, %v382, %v561
        %v601 = vsel %vm596, %v566, %v572
        %v602 = vsel %vm596, %v567, %v573
        %v603 = vsel %vm596, %v500, %v592
        %v604 = vsel %vm596, %v501, %v593
        %v605 = vld [vmem:[#allocation4] sm:$0xf]
        %v606 = vpack.c.bf16 %v599, %v597
        %v607 = vpack.c.bf16 %v600, %v598
        %v608 = vpack.c.bf16 %v603, %v601
        %v609 = vpack.c.bf16 %v604, %v602
        %v610 = vpack.c.bf16 %v536, %v536
        %v611 = vpack.c.bf16 %v537, %v537
        %v612 = vld [vmem:[%s2] sm:$0xff]
        %614 = vset.pattern.permute.xlu0 0
        %615 = vperm.xlu0 %614, %v612
        %v616 = vpop.permute.xlu0 %615
        %vm618 = vcmask 293888
        %v620 = vsel %vm618, %v605, 0
        %vm622 = vcmask 1041408
        %v624 = vsel %vm622, %v610, 0
        %v627 = vsel %vm622, %v611, 0
        %629 = vmatpush.bf16.msra.mxu0 0
        %630 = vmatpush.bf16.msra.mxu0 0
        %631 = vmatpush.bf16.msra.mxu0 0
        %632 = vmatpush.bf16.msra.mxu0 0
        %633 = vmatpush.bf16.msra.mxu0 0
        %634 = vmatpush.bf16.msra.mxu0 %v624
        %635 = vmatpush.bf16.msra.mxu0 %v608
        %636 = vmatpush.bf16.msra.mxu0 %v606
        %637 = vmatmul.bf16.gmra.mxu0 %v620
        %v638 = vpop.f32.mrf.mxu0
        %v639 = vadd.f32 %v616, %v638
        %v640 = vpop.f32.mrf.mxu0
        %641 = vdwg.mxu0
        %642 = vmatpush.bf16.msra.mxu0 0
        %643 = vmatpush.bf16.msra.mxu0 0
        %644 = vmatpush.bf16.msra.mxu0 0
        %645 = vmatpush.bf16.msra.mxu0 0
        %646 = vmatpush.bf16.msra.mxu0 0
        %647 = vmatpush.bf16.msra.mxu0 %v627
        %648 = vmatpush.bf16.msra.mxu0 %v609
        %649 = vmatpush.bf16.msra.mxu0 %v607
        %650 = vmatmul.bf16.gmra.mxu0 %v620
        %v651 = vpop.f32.mrf.mxu0
        %v652 = vadd.f32 %v616, %v651
        %v653 = vpop.f32.mrf.mxu0
        %654 = vdwg.mxu0
        %vm655 = vcmp.gt.f32.partialorder %v639, 0.0
        %vm656 = vcmp.gt.f32.partialorder %v652, 0.0
        %v657 = vmul.f32 %v639, 0.01
        %v658 = vmul.f32 %v652, 0.01
        %v659 = vsel %vm655, %v639, %v657
        %v660 = vsel %vm656, %v652, %v658
        %661 = vst [vmem:[#allocation3 + $0x8] sm:$0xff] %v659
        %662 = vst [vmem:[#allocation3 + $0x10] sm:$0xff] %v660
        %664 = vrot.lane.b32.xlu0 %v659, 96
        %v665 = vpop.permute.xlu0 %664
        %vm667 = vcmask 1048448
        %668 = vst.msk [vmem:[#allocation3] sm:$0xff] %vm667, %v665
        %670 = vrot.lane.b32.xlu0 %v660, 32
        %v671 = vpop.permute.xlu0 %670
        %673 = vst.msk [vmem:[#allocation3 + $0x18] sm:$0xff] %vm553, %v671
        %v674 = vld [vmem:[#allocation3] sm:$0xff]
        %v675 = vld [vmem:[#allocation3 + $0x8] sm:$0xff]
        %v676 = vld [vmem:[#allocation3 + $0x10] sm:$0xff]
        %680 = vrot.lane.b32.xlu0 %v674, 15
        %v681 = vpop.permute.xlu0 %680
        %682 = vrot.lane.b32.xlu0 %v675, 15
        %v683 = vpop.permute.xlu0 %682
        %684 = vrot.lane.b32.xlu0 %v676, 15
        %v685 = vpop.permute.xlu0 %684
        %v686 = vsel %vm319, %v681, %v683
        %v687 = vsel %vm319, %v683, %v685
        %690 = vrot.lane.b32.xlu0 %v674, 17
        %v691 = vpop.permute.xlu0 %690
        %692 = vrot.lane.b32.xlu0 %v675, 17
        %v693 = vpop.permute.xlu0 %692
        %694 = vrot.lane.b32.xlu0 %v676, 17
        %v695 = vpop.permute.xlu0 %694
        %v696 = vsel %vm336, %v691, %v693
        %v697 = vsel %vm336, %v693, %v695
        %v700 = vsel %vm303, %v686, %v696
        %v701 = vsel %vm304, %v687, %v697
        %v702 = vsel %vm347, %v696, %v686
        %v703 = vsel %vm348, %v697, %v687
        %v704 = vld [vmem:[#allocation3 + $0x8] sm:$0xff]
        %v705 = vld [vmem:[#allocation3 + $0x10] sm:$0xff]
        %v706 = vld [vmem:[#allocation3 + $0x18] sm:$0xff]
        %710 = vrot.lane.b32.xlu0 %v704, 127
        %v711 = vpop.permute.xlu0 %710
        %712 = vrot.lane.b32.xlu0 %v705, 127
        %v713 = vpop.permute.xlu0 %712
        %714 = vrot.lane.b32.xlu0 %v706, 127
        %v715 = vpop.permute.xlu0 %714
        %v716 = vsel %vm401, %v711, %v713
        %v717 = vsel %vm401, %v713, %v715
        %720 = vrot.lane.b32.xlu0 %v674, 1
        %v721 = vpop.permute.xlu0 %720
        %722 = vrot.lane.b32.xlu0 %v675, 1
        %v723 = vpop.permute.xlu0 %722
        %724 = vrot.lane.b32.xlu0 %v676, 1
        %v725 = vpop.permute.xlu0 %724
        %v726 = vsel %vm420, %v721, %v723
        %v727 = vsel %vm420, %v723, %v725
        %v730 = vsel %vm303, %v716, %v726
        %v731 = vsel %vm304, %v717, %v727
        %v732 = vsel %vm347, %v726, %v716
        %v733 = vsel %vm348, %v727, %v717
        %734 = vrot.lane.b32.xlu0 %v704, 111
        %v735 = vpop.permute.xlu0 %734
        %736 = vrot.lane.b32.xlu0 %v705, 111
        %v737 = vpop.permute.xlu0 %736
        %738 = vrot.lane.b32.xlu0 %v706, 111
        %v739 = vpop.permute.xlu0 %738
        %v740 = vsel %vm478, %v735, %v737
        %v741 = vsel %vm478, %v737, %v739
        %744 = vrot.lane.b32.xlu0 %v704, 113
        %v745 = vpop.permute.xlu0 %744
        %746 = vrot.lane.b32.xlu0 %v705, 113
        %v747 = vpop.permute.xlu0 %746
        %748 = vrot.lane.b32.xlu0 %v706, 113
        %v749 = vpop.permute.xlu0 %748
        %v750 = vsel %vm495, %v745, %v747
        %v751 = vsel %vm495, %v747, %v749
        %v754 = vsel %vm303, %v740, %v750
        %v755 = vsel %vm304, %v741, %v751
        %v756 = vsel %vm347, %v750, %v740
        %v757 = vsel %vm348, %v751, %v741
        %758 = vrot.lane.b32.xlu0 %v674, 16
        %v759 = vpop.permute.xlu0 %758
        %760 = vrot.lane.b32.xlu0 %v675, 16
        %v761 = vpop.permute.xlu0 %760
        %762 = vrot.lane.b32.xlu0 %v676, 16
        %v763 = vpop.permute.xlu0 %762
        %v764 = vsel %vm553, %v759, %v761
        %v765 = vsel %vm553, %v761, %v763
        %768 = vrot.lane.b32.xlu0 %v704, 112
        %v769 = vpop.permute.xlu0 %768
        %770 = vrot.lane.b32.xlu0 %v705, 112
        %v771 = vpop.permute.xlu0 %770
        %772 = vrot.lane.b32.xlu0 %v706, 112
        %v773 = vpop.permute.xlu0 %772
        %v774 = vsel %vm591, %v769, %v771
        %v775 = vsel %vm591, %v771, %v773
        %v778 = vld [vmem:[#allocation7] sm:$0xf]
        %v779 = vpack.c.bf16 %v764, %v700
        %v780 = vpack.c.bf16 %v765, %v701
        %v781 = vpack.c.bf16 %v730, %v702
        %v782 = vpack.c.bf16 %v731, %v703
        %v783 = vpack.c.bf16 %v732, %v675
        %v784 = vpack.c.bf16 %v733, %v676
        %v785 = vpack.c.bf16 %v774, %v754
        %v786 = vpack.c.bf16 %v775, %v755
        %v787 = vpack.c.bf16 %v756, %v756
        %v788 = vpack.c.bf16 %v757, %v757
        %v789 = vld [vmem:[%s4] sm:$0xff]
        %791 = vset.pattern.permute.xlu0 0
        %792 = vperm.xlu0 %791, %v789
        %v793 = vpop.permute.xlu0 %792
        %vm795 = vcmask 588800
        %v797 = vsel %vm795, %v778, 0
        %v800 = vsel %vm596, %v787, 0
        %v803 = vsel %vm596, %v788, 0
        %805 = vmatpush.bf16.msra.mxu0 0
        %806 = vmatpush.bf16.msra.mxu0 0
        %807 = vmatpush.bf16.msra.mxu0 0
        %808 = vmatpush.bf16.msra.mxu0 %v800
        %809 = vmatpush.bf16.msra.mxu0 %v785
        %810 = vmatpush.bf16.msra.mxu0 %v783
        %811 = vmatpush.bf16.msra.mxu0 %v781
        %812 = vmatpush.bf16.msra.mxu0 %v779
        %813 = vmatmul.bf16.gmra.mxu0 %v797
        %v814 = vpop.f32.mrf.mxu0
        %v815 = vadd.f32 %v793, %v814
        %v816 = vpop.f32.mrf.mxu0
        %817 = vdwg.mxu0
        %818 = vmatpush.bf16.msra.mxu0 0
        %819 = vmatpush.bf16.msra.mxu0 0
        %820 = vmatpush.bf16.msra.mxu0 0
        %821 = vmatpush.bf16.msra.mxu0 %v803
        %822 = vmatpush.bf16.msra.mxu0 %v786
        %823 = vmatpush.bf16.msra.mxu0 %v784
        %824 = vmatpush.bf16.msra.mxu0 %v782
        %825 = vmatpush.bf16.msra.mxu0 %v780
        %826 = vmatmul.bf16.gmra.mxu0 %v797
        %v827 = vpop.f32.mrf.mxu0
        %v828 = vadd.f32 %v793, %v827
        %v829 = vpop.f32.mrf.mxu0
        %830 = vdwg.mxu0
        %vm831 = vcmp.gt.f32.partialorder %v815, 0.0
        %vm832 = vcmp.gt.f32.partialorder %v828, 0.0
        %v833 = vmul.f32 %v815, 0.01
        %v834 = vmul.f32 %v828, 0.01
        %v835 = vsel %vm831, %v815, %v833
        %v836 = vsel %vm832, %v828, %v834
        %837 = vst [vmem:[%s247] sm:$0xff] %v835
        %838 = vst [vmem:[%s247 + $0x8] sm:$0xff] %v836
        %s839 = sand.u32 %s139, 1
        %s840 = scalar_lea.sflag [#allocation6], %s839
        %s841 = sand.u32 %s139, 1
        %s842 = smul.addr %s841, 16
        %s843 = scalar_lea.vmem [#allocation9], %s842
        // Predicated region
        $region49: #{tpu_custom_call.1} parent=39 // pred_check
          %p844 = pneg %p149
        $region50: #{tpu_custom_call.1} parent=39 // pred_check_branch
          %846 = sbr.rel (%p844) target = $region52
        $region51: #{tpu_custom_call.1} parent=39 // pred_region
          %848 = vsyncadd %s840, 0
          %s849 = smul.addr %s21, 2
          %s850 = smul.addr %s849, 8
          %s851 = scalar_lea.hbm %s5, %s850
          %s853 = sshll.u32 %s843, 4
          %s854 = int_to_ptr.vmem [resolvable:$true] %s853
          %s855 = sshll.u32 %s851, 4
          %s856 = int_to_ptr.hbm [resolvable:$true] %s855
          %858 = dma.vmem_to_hbm [thread:$0]  %s854, 256, %s856, %s840
        $region52: #{tpu_custom_call.1} parent=39 // pred_fallthru
          _
      $region40: #{tpu_custom_call.1} parent=5 // pred_fallthru
        _
      %p859 = scmp.le.s32.totalorder 2, %s16
      // Predicated region
      $region53: #{tpu_custom_call.1} parent=5 // pred_check
        %p860 = pneg %p859
      $region54: #{tpu_custom_call.1} parent=5 // pred_check_branch
        %862 = sbr.rel (%p860) target = $region56
      $region55: #{tpu_custom_call.1} parent=5 // pred_region
        %s863 = ssub.s32 %s16, 2
        // Predicated region
        $region57: #{tpu_custom_call.1} parent=55 // pred_check
          %p864 = pneg %p155
        $region58: #{tpu_custom_call.1} parent=55 // pred_check_branch
          %866 = sbr.rel (%p864) target = $region60
        $region59: #{tpu_custom_call.1} parent=55 // pred_region
          %s867 = sand.u32 %s140, 1
          %s868 = scalar_lea.sflag [#allocation6], %s867
          %s869 = sand.u32 %s140, 1
          %s870 = smul.addr %s869, 16
          %s871 = scalar_lea.vmem [#allocation9], %s870
          %873 = dma.done %s868, 256
        $region60: #{tpu_custom_call.1} parent=55 // pred_fallthru
          _
      $region56: #{tpu_custom_call.1} parent=5 // pred_fallthru
        _
    $region6: #{tpu_custom_call.1} parent=1 // loop_footer
      %s20 = sadd.s32 1, %s16
    $region7: #{tpu_custom_call.1} parent=1 // loop_footer_branch
      %15 = sbr.rel target = $region3
    $region8: #{tpu_custom_call.1} parent=1 // loop_exit
      _
    %874 = vsyncpa [#allocation5], 1
    %s875 = scalar_lea.sflag [#allocation5], 1
    %876 = vsyncpa %s875, 1
    %877 = vsyncpa [#allocation8], 1
    %878 = vsyncpa [#allocation6], 1
    %s879 = scalar_lea.sflag [#allocation6], 1
    %880 = vsyncpa %s879, 1

</llo_original>
